<compile_context>
chip_gen: v7x
topology: tpu7x:2x2x1
jax: 0.10.0
libtpu: 0.0.40
codegen_flags: <defaults>
</compile_context>

<pallas_src>
import functools

import jax
import jax.numpy as jnp
from jax.experimental import pallas as pl
from jax.experimental.pallas import tpu as pltpu

_HALO = 8                      # halo rows from each neighboring tile (>= max k//2)
_VMEM_BUDGET = 32 * 2**20      # conservative: fits every generation's scoped VMEM


def _round_up(x, m):
    return ((x + m - 1) // m) * m


def _default_tile_t():
    """Per-chip default time tile: big on v5e/v6e (128 MiB VMEM), smaller on v7x."""
    try:
        kind = jax.devices()[0].device_kind.lower()
    except Exception:
        kind = ""
    if "v7" in kind or "7x" in kind:
        return 256
    return 512


def _estimate_vmem_bytes(tile_t, d_in, h_pad, ck_pad, n_out, n_taps,
                         use_im2col, weight_bufs=2):
    """Generous VMEM estimate: pipelined blocks + weights + live temporaries."""
    rows = tile_t + 2 * _HALO
    # Double-buffered time-varying blocks (x tile + two halos, output tile).
    io = 2 * (rows * d_in * 4 + tile_t * n_out * 4)
    # Grid-invariant operands (bf16 weights, f32 biases).
    wt = weight_bufs * ((d_in * h_pad + n_taps * h_pad * ck_pad
                         + ck_pad * n_out) * 2
                        + (h_pad + ck_pad + n_out) * 4)
    # In-kernel temporaries: x_all bf16, h f32 + hp bf16, cat f32 + bf16,
    # out f32, plus the im2col slab (or a few live per-tap slice copies).
    tmp = (rows * d_in * 2 + rows * h_pad * 6
           + tile_t * ck_pad * 6 + tile_t * n_out * 4)
    tmp += tile_t * h_pad * 2 * (n_taps if use_im2col else 4)
    return io + wt + tmp


def _convbank_kernel(x_ref, xprev_ref, xnext_ref, w_in_ref, b_in_ref,
                     w_bank_ref, b_cat_ref, w_out_ref, b_out_ref, o_ref,
                     *, max_pad, tile_t, t_true, h_dim, use_im2col):
    """One grid step == one (batch, time-tile) pair.

    x_ref      (1, tile_t, D_in)          current time tile
    xprev_ref  (1, 8, D_in)               8 rows immediately before the tile
    xnext_ref  (1, 8, D_in)               8 rows immediately after the tile
    w_in_ref   (D_in, H_pad) bf16         b_in_ref (1, H_pad) f32
    w_bank_ref (n_taps*H_pad, CK_pad) bf16  -- tap-fused, zero-padded conv bank
    b_cat_ref  (1, CK_pad) f32
    w_out_ref  (CK_pad, n_out_pad) bf16   b_out_ref (1, n_out_pad) f32
    o_ref      (1, tile_t, n_out_pad)
    """
    t = pl.program_id(1)
    n_taps = 2 * max_pad + 1
    rows_total = tile_t + 2 * _HALO

    # --- in_linear + ReLU on [prev halo | tile | next halo]: ONE matmul ---
    x_all = jnp.concatenate(
        [xprev_ref[0].astype(jnp.bfloat16),
         x_ref[0].astype(jnp.bfloat16),
         xnext_ref[0].astype(jnp.bfloat16)], axis=0)        # (rows_total, D_in)
    h = jnp.dot(x_all, w_in_ref[...], preferred_element_type=jnp.float32)
    h = jnp.maximum(h + b_in_ref[...], 0.0)                 # f32 elementwise

    # Single validity mask: zero rows whose GLOBAL index is outside [0, T)
    # (start-of-sequence halo, end-of-sequence halo, padded tail rows).
    # Dropout == identity (eval mode).
    rows = jax.lax.broadcasted_iota(jnp.int32, (rows_total, 1), 0)
    gidx = t * tile_t + rows - _HALO
    h = jnp.where(jnp.logical_and(gidx >= 0, gidx < t_true), h, 0.0)
    hp = h.astype(jnp.bfloat16)                 # cast ONCE; slices below are bf16

    ck = b_cat_ref.shape[1]
    base = _HALO - max_pad

    if use_im2col:
        # Small H / C*K: build one (tile_t, n_taps*H) slab and do a single
        # matmul -- taps accumulate in the MXU K dimension.
        slab = jnp.concatenate(
            [hp[base + j:base + j + tile_t, :] for j in range(n_taps)], axis=1)
        cat = jnp.dot(slab, w_bank_ref[...], preferred_element_type=jnp.float32)
        cat = cat + b_cat_ref[...]
    else:
        # Chained per-tap accumulation (kept as a value chain so the v7x MRB
        # in-place accumulate can absorb the reduction).
        cat = jnp.broadcast_to(b_cat_ref[...], (tile_t, ck)).astype(jnp.float32)
        for j in range(n_taps):                          # static unroll
            cat = cat + jnp.dot(hp[base + j:base + j + tile_t, :],
                                w_bank_ref[j * h_dim:(j + 1) * h_dim, :],
                                preferred_element_type=jnp.float32)

    cat = jnp.maximum(cat, 0.0).astype(jnp.bfloat16)

    # --- out_linear (lane-dense: class dim padded to a 128 multiple) ---
    out = jnp.dot(cat, w_out_ref[...], preferred_element_type=jnp.float32)
    o_ref[0] = (out + b_out_ref[...]).astype(o_ref.dtype)


def convbank_forward(x, params, kernels, tile_t_max=None):
    """x: (B, T, D_in) float32.  params: dict of weights (see init_params)."""
    kernels = tuple(kernels)
    if any(k % 2 == 0 for k in kernels):
        raise ValueError("even kernel sizes not supported (see TODO above)")

    B, T, D_in = x.shape
    H = params["w_in"].shape[1]
    C = params["w_convs"][0].shape[2]
    K = len(kernels)
    n_class = params["w_out"].shape[1]
    max_pad = max(k // 2 for k in kernels)
    n_taps = 2 * max_pad + 1
    assert max_pad <= _HALO, "max kernel size must be <= 17"

    # --- lane-dense padded dims (zero padding provably contributes 0) ---
    ck = C * K
    ck_pad = _round_up(ck, 128)
    h_pad = _round_up(H, 128)
    n_out = _round_up(n_class, 128)
    use_im2col = (H < 128) or (ck < 128)

    # --- time tiling: per-chip default, split for B==1, fit VMEM budget ---
    if tile_t_max is None:
        tile_t_max = _default_tile_t()
    tile_t = min(_round_up(tile_t_max, 8), _round_up(T, 8))
    if B == 1 and T > 16:       # ensure >= 2 time tiles so both TCs get work
        tile_t = min(tile_t, _round_up((T + 1) // 2, 8))
    while (tile_t > 8 and
           _estimate_vmem_bytes(tile_t, D_in, h_pad, ck_pad, n_out, n_taps,
                                use_im2col) > _VMEM_BUDGET):
        tile_t = _round_up(max(tile_t // 2, 8), 8)
    est = _estimate_vmem_bytes(tile_t, D_in, h_pad, ck_pad, n_out, n_taps,
                               use_im2col)
    vmem_limit = int(min(max(2 * est, 32 * 2**20), 48 * 2**20))

    t_pad = _round_up(T, tile_t)
    n_t = t_pad // tile_t
    x_p = x if t_pad == T else jnp.pad(x, ((0, 0), (0, t_pad - T), (0, 0)))

    # --- weight packing (bf16 matmul operands, f32 biases) ---
    w_in = jnp.zeros((D_in, h_pad), jnp.float32)
    w_in = w_in.at[:, :H].set(params["w_in"]).astype(jnp.bfloat16)
    b_in = jnp.zeros((1, h_pad), jnp.float32)
    b_in = b_in.at[:, :H].set(params["b_in"].reshape(1, H))

    # Tap-fused conv bank: w_bank[j][:, i*C:(i+1)*C] is kernel i's tap for
    # global offset j (relative to -max_pad), zero where kernel i has no tap.
    w_bank = jnp.zeros((n_taps, h_pad, ck_pad), jnp.float32)
    for i, (k, w_c) in enumerate(zip(kernels, params["w_convs"])):
        pad = k // 2
        w_bank = w_bank.at[max_pad - pad:max_pad - pad + k, :H,
                           i * C:(i + 1) * C].set(w_c)
    w_bank = w_bank.reshape(n_taps * h_pad, ck_pad).astype(jnp.bfloat16)
    b_cat = jnp.zeros((1, ck_pad), jnp.float32)
    b_cat = b_cat.at[:, :ck].set(
        jnp.concatenate([b.reshape(1, C) for b in params["b_convs"]], axis=1))

    w_out = jnp.zeros((ck_pad, n_out), jnp.float32)
    w_out = w_out.at[:ck, :n_class].set(params["w_out"]).astype(jnp.bfloat16)
    b_out = jnp.zeros((1, n_out), jnp.float32)
    b_out = b_out.at[:, :n_class].set(params["b_out"].reshape(1, -1))

    blk8 = tile_t // 8
    nblk8 = t_pad // 8

    kernel_fn = functools.partial(_convbank_kernel, max_pad=max_pad,
                                  tile_t=tile_t, t_true=T, h_dim=h_pad,
                                  use_im2col=use_im2col)

    def run(single_buffer_weights):
        # Grid-invariant operands: single-buffer them (halves their VMEM).
        wkw = ({"pipeline_mode": pl.Buffered(1)}
               if single_buffer_weights else {})
        in_specs = [
            pl.BlockSpec((1, tile_t, D_in), lambda b, t: (b, t, 0)),
            # previous 8 rows (clamped at t==0; zeroed by the validity mask)
            pl.BlockSpec((1, _HALO, D_in),
                         lambda b, t: (b, jnp.maximum(t * blk8 - 1, 0), 0)),
            # next 8 rows (clamped at last tile; zeroed by the validity mask)
            pl.BlockSpec((1, _HALO, D_in),
                         lambda b, t: (b, jnp.minimum((t + 1) * blk8, nblk8 - 1), 0)),
            pl.BlockSpec((D_in, h_pad), lambda b, t: (0, 0), **wkw),
            pl.BlockSpec((1, h_pad), lambda b, t: (0, 0), **wkw),
            pl.BlockSpec((n_taps * h_pad, ck_pad), lambda b, t: (0, 0), **wkw),
            pl.BlockSpec((1, ck_pad), lambda b, t: (0, 0), **wkw),
            pl.BlockSpec((ck_pad, n_out), lambda b, t: (0, 0), **wkw),
            pl.BlockSpec((1, n_out), lambda b, t: (0, 0), **wkw),
        ]
        return pl.pallas_call(
            kernel_fn,
            out_shape=jax.ShapeDtypeStruct((B, t_pad, n_out), x.dtype),
            grid_spec=pltpu.PrefetchScalarGridSpec(
                num_scalar_prefetch=0,
                grid=(B, n_t),
                in_specs=in_specs,
                out_specs=pl.BlockSpec((1, tile_t, n_out),
                                       lambda b, t: (b, t, 0)),
            ),
            compiler_params=pltpu.CompilerParams(
                dimension_semantics=("parallel", "parallel"),
                vmem_limit_bytes=vmem_limit),
        )(x_p, x_p, x_p, w_in, b_in, w_bank, b_cat, w_out, b_out)

    try:
        out = run(True)
    except Exception:
        # pl.Buffered(1) unsupported on this jax/mosaic build -> default
        # double-buffered invariant weights (identical semantics).
        out = run(False)

    return out[:, :T, :n_class]


def init_params(key, input_dim, hidden_size, cnn_size, kernels, output_class_num):
    """Deterministic synthetic parameters (PyTorch layouts -> matmul layouts)."""
    ks = jax.random.split(key, 4 + 2 * len(kernels))
    scale = 0.05
    # nn.Linear weight is (out, in); store transposed (in, out) for x @ W.
    w_in = scale * jax.random.normal(ks[0], (input_dim, hidden_size), jnp.float32)
    b_in = scale * jax.random.normal(ks[1], (1, hidden_size), jnp.float32)
    w_convs, b_convs = [], []
    for i, k in enumerate(kernels):
        # nn.Conv1d weight is (C_out, C_in, k); store as (k, C_in, C_out).
        w_pt = scale * jax.random.normal(ks[2 + 2 * i],
                                         (cnn_size, hidden_size, k), jnp.float32)
        w_convs.append(jnp.transpose(w_pt, (2, 1, 0)))
        b_convs.append(scale * jax.random.normal(ks[3 + 2 * i], (1, cnn_size),
                                                 jnp.float32))
    latest = cnn_size * len(kernels)
    w_out = scale * jax.random.normal(ks[-2], (latest, output_class_num), jnp.float32)
    b_out = scale * jax.random.normal(ks[-1], (1, output_class_num), jnp.float32)
    return dict(w_in=w_in, b_in=b_in, w_convs=w_convs, b_convs=b_convs,
                w_out=w_out, b_out=b_out)


def reference_forward(x, params, kernels):
    """Pure-JAX f32 reference (mirrors the PyTorch forward, eval-mode dropout)."""
    h = jnp.maximum(jnp.einsum("btd,dh->bth", x, params["w_in"]) + params["b_in"], 0.0)
    feats = []
    for k, w_c, b_c in zip(kernels, params["w_convs"], params["b_convs"]):
        pad = k // 2
        hp = jnp.pad(h, ((0, 0), (pad, pad), (0, 0)))
        acc = jnp.zeros(h.shape[:2] + (w_c.shape[2],), jnp.float32) + b_c
        T = h.shape[1]
        for j in range(k):
            acc = acc + jnp.einsum("bth,hc->btc", hp[:, j:j + T, :], w_c[j])
        feats.append(jnp.maximum(acc, 0.0))
    cat = jnp.concatenate(feats, axis=-1)
    return jnp.einsum("btc,cn->btn", cat, params["w_out"]) + params["b_out"]


if __name__ == "__main__":
    # Small shapes consistent with the module's forward.
    B, T = 2, 16
    input_dim, hidden_size, cnn_size = 32, 32, 32
    kernels = (3, 5)
    output_class_num = 16

    key = jax.random.PRNGKey(0)
    k_x, k_p = jax.random.split(key)
    x = jax.random.normal(k_x, (B, T, input_dim), jnp.float32)
    params = init_params(k_p, input_dim, hidden_size, cnn_size, kernels,
                         output_class_num)

    out = convbank_forward(x, params, kernels)
    out = jax.block_until_ready(out)

    ref = reference_forward(x, params, kernels)
    assert out.shape == (B, T, output_class_num)
    # bf16 matmul operands with f32 accumulation -> slightly looser tolerance.
    assert jnp.allclose(out, ref, atol=2e-2, rtol=2e-2), (
        float(jnp.max(jnp.abs(out - ref))))

    print("KERNEL_OK")
</pallas_src>

<mosaic_0001>
module attributes {stable_mosaic.version = 11 : i64} {
  func.func @_convbank_kernel(%arg0: i32, %arg1: i32, %arg2: memref<1x16x32xf32, #tpu.memory_space<vmem>>, %arg3: memref<1x8x32xf32, #tpu.memory_space<vmem>>, %arg4: memref<1x8x32xf32, #tpu.memory_space<vmem>>, %arg5: memref<32x128xbf16, #tpu.memory_space<vmem>>, %arg6: memref<1x128xf32, #tpu.memory_space<vmem>>, %arg7: memref<640x128xbf16, #tpu.memory_space<vmem>>, %arg8: memref<1x128xf32, #tpu.memory_space<vmem>>, %arg9: memref<128x128xbf16, #tpu.memory_space<vmem>>, %arg10: memref<1x128xf32, #tpu.memory_space<vmem>>, %arg11: memref<1x16x128xf32, #tpu.memory_space<vmem>>) attributes {dimension_semantics = [#tpu.dimension_semantics<parallel>, #tpu.dimension_semantics<parallel>], iteration_bounds = array<i64: 2, 1>, scalar_prefetch = 0 : i64, scratch_operands = 0 : i64, tpu.core_type = #tpu.core_type<tc>, window_params = [{transform_indices = @transform_0, window_bounds = array<i64: 1, 16, 32>}, {transform_indices = @transform_1, window_bounds = array<i64: 1, 8, 32>}, {transform_indices = @transform_2, window_bounds = array<i64: 1, 8, 32>}, {pipeline_mode = #tpu.pipeline_mode<synchronous>, transform_indices = @transform_3, window_bounds = array<i64: 32, 128>}, {pipeline_mode = #tpu.pipeline_mode<synchronous>, transform_indices = @transform_4, window_bounds = array<i64: 1, 128>}, {pipeline_mode = #tpu.pipeline_mode<synchronous>, transform_indices = @transform_5, window_bounds = array<i64: 640, 128>}, {pipeline_mode = #tpu.pipeline_mode<synchronous>, transform_indices = @transform_6, window_bounds = array<i64: 1, 128>}, {pipeline_mode = #tpu.pipeline_mode<synchronous>, transform_indices = @transform_7, window_bounds = array<i64: 128, 128>}, {pipeline_mode = #tpu.pipeline_mode<synchronous>, transform_indices = @transform_8, window_bounds = array<i64: 1, 128>}, {transform_indices = @transform_9, window_bounds = array<i64: 1, 16, 128>}]} {
    %c0 = arith.constant 0 : index
    %c0_0 = arith.constant 0 : index
    %c0_1 = arith.constant 0 : index
    %0 = vector.load %arg3[%c0, %c0_0, %c0_1] : memref<1x8x32xf32, #tpu.memory_space<vmem>>, vector<1x8x32xf32>
    %1 = vector.shape_cast %0 : vector<1x8x32xf32> to vector<8x32xf32>
    %2 = arith.truncf %1 : vector<8x32xf32> to vector<8x32xbf16>
    %c0_2 = arith.constant 0 : index
    %c0_3 = arith.constant 0 : index
    %c0_4 = arith.constant 0 : index
    %3 = vector.load %arg2[%c0_2, %c0_3, %c0_4] : memref<1x16x32xf32, #tpu.memory_space<vmem>>, vector<1x16x32xf32>
    %4 = vector.shape_cast %3 : vector<1x16x32xf32> to vector<16x32xf32>
    %5 = arith.truncf %4 : vector<16x32xf32> to vector<16x32xbf16>
    %c0_5 = arith.constant 0 : index
    %c0_6 = arith.constant 0 : index
    %c0_7 = arith.constant 0 : index
    %6 = vector.load %arg4[%c0_5, %c0_6, %c0_7] : memref<1x8x32xf32, #tpu.memory_space<vmem>>, vector<1x8x32xf32>
    %7 = vector.shape_cast %6 : vector<1x8x32xf32> to vector<8x32xf32>
    %8 = arith.truncf %7 : vector<8x32xf32> to vector<8x32xbf16>
    %9 = tpu.concatenate %2, %5, %8 in 0 : vector<8x32xbf16>, vector<16x32xbf16>, vector<8x32xbf16> -> vector<32x32xbf16>
    %c0_8 = arith.constant 0 : index
    %c0_9 = arith.constant 0 : index
    %10 = vector.load %arg5[%c0_8, %c0_9] : memref<32x128xbf16, #tpu.memory_space<vmem>>, vector<32x128xbf16>
    %cst = arith.constant dense<0.000000e+00> : vector<32x128xf32>
    %11 = tpu.matmul %9, %10, %cst {dimension_numbers = #tpu.dot_dimension_numbers<[1], [0], [0], [1], [0, 0, 1, 1], [], []>} : vector<32x32xbf16>, vector<32x128xbf16>, vector<32x128xf32> -> vector<32x128xf32>
    %c0_10 = arith.constant 0 : index
    %c0_11 = arith.constant 0 : index
    %12 = vector.load %arg6[%c0_10, %c0_11] : memref<1x128xf32, #tpu.memory_space<vmem>>, vector<1x128xf32>
    %13 = vector.broadcast %12 : vector<1x128xf32> to vector<32x128xf32>
    %14 = arith.addf %11, %13 : vector<32x128xf32>
    %cst_12 = arith.constant 0.000000e+00 : f32
    %15 = vector.broadcast %cst_12 : f32 to vector<32x128xf32>
    %16 = arith.maximumf %14, %15 : vector<32x128xf32>
    %17 = tpu.iota {dimensions = array<i32: 0>} : vector<32x1xi32>
    %c16_i32 = arith.constant 16 : i32
    %18 = arith.muli %arg1, %c16_i32 : i32
    %19 = vector.broadcast %18 : i32 to vector<32x1xi32>
    %20 = arith.addi %19, %17 : vector<32x1xi32>
    %c8_i32 = arith.constant 8 : i32
    %21 = vector.broadcast %c8_i32 : i32 to vector<32x1xi32>
    %22 = arith.subi %20, %21 : vector<32x1xi32>
    %c0_i32 = arith.constant 0 : i32
    %23 = vector.broadcast %c0_i32 : i32 to vector<32x1xi32>
    %24 = arith.cmpi sge, %22, %23 : vector<32x1xi32>
    %c16_i32_13 = arith.constant 16 : i32
    %25 = vector.broadcast %c16_i32_13 : i32 to vector<32x1xi32>
    %26 = arith.cmpi slt, %22, %25 : vector<32x1xi32>
    %27 = arith.andi %24, %26 : vector<32x1xi1>
    %cst_14 = arith.constant 0.000000e+00 : f32
    %28 = vector.shape_cast %27 : vector<32x1xi1> to vector<32x1xi1>
    %29 = vector.broadcast %28 : vector<32x1xi1> to vector<32x128xi1>
    %30 = vector.broadcast %cst_14 : f32 to vector<32x128xf32>
    %31 = arith.select %29, %16, %30 : vector<32x128xi1>, vector<32x128xf32>
    %32 = arith.truncf %31 : vector<32x128xf32> to vector<32x128xbf16>
    %33 = vector.extract_strided_slice %32 {offsets = [6, 0], sizes = [16, 128], strides = [1, 1]} : vector<32x128xbf16> to vector<16x128xbf16>
    %34 = vector.extract_strided_slice %32 {offsets = [7, 0], sizes = [16, 128], strides = [1, 1]} : vector<32x128xbf16> to vector<16x128xbf16>
    %35 = vector.extract_strided_slice %32 {offsets = [8, 0], sizes = [16, 128], strides = [1, 1]} : vector<32x128xbf16> to vector<16x128xbf16>
    %36 = vector.extract_strided_slice %32 {offsets = [9, 0], sizes = [16, 128], strides = [1, 1]} : vector<32x128xbf16> to vector<16x128xbf16>
    %37 = vector.extract_strided_slice %32 {offsets = [10, 0], sizes = [16, 128], strides = [1, 1]} : vector<32x128xbf16> to vector<16x128xbf16>
    %38 = tpu.concatenate %33, %34, %35, %36, %37 in 1 : vector<16x128xbf16>, vector<16x128xbf16>, vector<16x128xbf16>, vector<16x128xbf16>, vector<16x128xbf16> -> vector<16x640xbf16>
    %c0_15 = arith.constant 0 : index
    %c0_16 = arith.constant 0 : index
    %39 = vector.load %arg7[%c0_15, %c0_16] : memref<640x128xbf16, #tpu.memory_space<vmem>>, vector<640x128xbf16>
    %cst_17 = arith.constant dense<0.000000e+00> : vector<16x128xf32>
    %40 = tpu.matmul %38, %39, %cst_17 {dimension_numbers = #tpu.dot_dimension_numbers<[1], [0], [0], [1], [0, 0, 1, 1], [], []>} : vector<16x640xbf16>, vector<640x128xbf16>, vector<16x128xf32> -> vector<16x128xf32>
    %c0_18 = arith.constant 0 : index
    %c0_19 = arith.constant 0 : index
    %41 = vector.load %arg8[%c0_18, %c0_19] : memref<1x128xf32, #tpu.memory_space<vmem>>, vector<1x128xf32>
    %42 = vector.broadcast %41 : vector<1x128xf32> to vector<16x128xf32>
    %43 = arith.addf %40, %42 : vector<16x128xf32>
    %cst_20 = arith.constant 0.000000e+00 : f32
    %44 = vector.broadcast %cst_20 : f32 to vector<16x128xf32>
    %45 = arith.maximumf %43, %44 : vector<16x128xf32>
    %46 = arith.truncf %45 : vector<16x128xf32> to vector<16x128xbf16>
    %c0_21 = arith.constant 0 : index
    %c0_22 = arith.constant 0 : index
    %47 = vector.load %arg9[%c0_21, %c0_22] : memref<128x128xbf16, #tpu.memory_space<vmem>>, vector<128x128xbf16>
    %cst_23 = arith.constant dense<0.000000e+00> : vector<16x128xf32>
    %48 = tpu.matmul %46, %47, %cst_23 {dimension_numbers = #tpu.dot_dimension_numbers<[1], [0], [0], [1], [0, 0, 1, 1], [], []>} : vector<16x128xbf16>, vector<128x128xbf16>, vector<16x128xf32> -> vector<16x128xf32>
    %c0_24 = arith.constant 0 : index
    %c0_25 = arith.constant 0 : index
    %49 = vector.load %arg10[%c0_24, %c0_25] : memref<1x128xf32, #tpu.memory_space<vmem>>, vector<1x128xf32>
    %50 = vector.broadcast %49 : vector<1x128xf32> to vector<16x128xf32>
    %51 = arith.addf %48, %50 : vector<16x128xf32>
    %c0_26 = arith.constant 0 : index
    %c0_27 = arith.constant 0 : index
    %c0_28 = arith.constant 0 : index
    %52 = vector.load %arg11[%c0_26, %c0_27, %c0_28] : memref<1x16x128xf32, #tpu.memory_space<vmem>>, vector<1x16x128xf32>
    %53 = vector.shape_cast %52 : vector<1x16x128xf32> to vector<16x128xf32>
    %54 = vector.shape_cast %51 : vector<16x128xf32> to vector<1x16x128xf32>
    tpu.vector_store %arg11[%c0_26, %c0_27, %c0_28], %54 {strides = array<i32>} : memref<1x16x128xf32, #tpu.memory_space<vmem>>, vector<1x16x128xf32>,
    return
  }
  func.func @transform_0(%arg0: i32, %arg1: i32) -> (i32, i32, i32) {
    %c0_i32 = arith.constant 0 : i32
    %c0_i32_0 = arith.constant 0 : i32
    return %arg0, %arg1, %c0_i32 : i32, i32, i32
  }
  func.func @transform_1(%arg0: i32, %arg1: i32) -> (i32, i32, i32) {
    %c2_i32 = arith.constant 2 : i32
    %0 = arith.muli %arg1, %c2_i32 : i32
    %c1_i32 = arith.constant 1 : i32
    %1 = arith.subi %0, %c1_i32 : i32
    %c0_i32 = arith.constant 0 : i32
    %2 = arith.maxsi %1, %c0_i32 : i32
    %c0_i32_0 = arith.constant 0 : i32
    %c0_i32_1 = arith.constant 0 : i32
    return %arg0, %2, %c0_i32_0 : i32, i32, i32
  }
  func.func @transform_2(%arg0: i32, %arg1: i32) -> (i32, i32, i32) {
    %c1_i32 = arith.constant 1 : i32
    %0 = arith.addi %arg1, %c1_i32 : i32
    %c2_i32 = arith.constant 2 : i32
    %1 = arith.muli %0, %c2_i32 : i32
    %c1_i32_0 = arith.constant 1 : i32
    %2 = arith.minsi %1, %c1_i32_0 : i32
    %c0_i32 = arith.constant 0 : i32
    %c0_i32_1 = arith.constant 0 : i32
    return %arg0, %2, %c0_i32 : i32, i32, i32
  }
  func.func @transform_3(%arg0: i32, %arg1: i32) -> (i32, i32) {
    %c0_i32 = arith.constant 0 : i32
    %c0_i32_0 = arith.constant 0 : i32
    %c0_i32_1 = arith.constant 0 : i32
    return %c0_i32, %c0_i32_0 : i32, i32
  }
  func.func @transform_4(%arg0: i32, %arg1: i32) -> (i32, i32) {
    %c0_i32 = arith.constant 0 : i32
    %c0_i32_0 = arith.constant 0 : i32
    %c0_i32_1 = arith.constant 0 : i32
    return %c0_i32, %c0_i32_0 : i32, i32
  }
  func.func @transform_5(%arg0: i32, %arg1: i32) -> (i32, i32) {
    %c0_i32 = arith.constant 0 : i32
    %c0_i32_0 = arith.constant 0 : i32
    %c0_i32_1 = arith.constant 0 : i32
    return %c0_i32, %c0_i32_0 : i32, i32
  }
  func.func @transform_6(%arg0: i32, %arg1: i32) -> (i32, i32) {
    %c0_i32 = arith.constant 0 : i32
    %c0_i32_0 = arith.constant 0 : i32
    %c0_i32_1 = arith.constant 0 : i32
    return %c0_i32, %c0_i32_0 : i32, i32
  }
  func.func @transform_7(%arg0: i32, %arg1: i32) -> (i32, i32) {
    %c0_i32 = arith.constant 0 : i32
    %c0_i32_0 = arith.constant 0 : i32
    %c0_i32_1 = arith.constant 0 : i32
    return %c0_i32, %c0_i32_0 : i32, i32
  }
  func.func @transform_8(%arg0: i32, %arg1: i32) -> (i32, i32) {
    %c0_i32 = arith.constant 0 : i32
    %c0_i32_0 = arith.constant 0 : i32
    %c0_i32_1 = arith.constant 0 : i32
    return %c0_i32, %c0_i32_0 : i32, i32
  }
  func.func @transform_9(%arg0: i32, %arg1: i32) -> (i32, i32, i32) {
    %c0_i32 = arith.constant 0 : i32
    %c0_i32_0 = arith.constant 0 : i32
    return %arg0, %arg1, %c0_i32 : i32, i32, i32
  }
}

module attributes {stable_mosaic.version = 11 : i64} {
  func.func @_convbank_kernel(%arg0: i32, %arg1: i32, %arg2: memref<1x16x32xf32, #tpu.memory_space<vmem>>, %arg3: memref<1x8x32xf32, #tpu.memory_space<vmem>>, %arg4: memref<1x8x32xf32, #tpu.memory_space<vmem>>, %arg5: memref<32x128xbf16, #tpu.memory_space<vmem>>, %arg6: memref<1x128xf32, #tpu.memory_space<vmem>>, %arg7: memref<640x128xbf16, #tpu.memory_space<vmem>>, %arg8: memref<1x128xf32, #tpu.memory_space<vmem>>, %arg9: memref<128x128xbf16, #tpu.memory_space<vmem>>, %arg10: memref<1x128xf32, #tpu.memory_space<vmem>>, %arg11: memref<1x16x128xf32, #tpu.memory_space<vmem>>) attributes {dimension_semantics = [#tpu.dimension_semantics<parallel>, #tpu.dimension_semantics<parallel>], iteration_bounds = array<i64: 2, 1>, scalar_prefetch = 0 : i64, scratch_operands = 0 : i64, tpu.core_type = #tpu.core_type<tc>, window_params = [{transform_indices = @transform_0, window_bounds = array<i64: 1, 16, 32>}, {transform_indices = @transform_1, window_bounds = array<i64: 1, 8, 32>}, {transform_indices = @transform_2, window_bounds = array<i64: 1, 8, 32>}, {pipeline_mode = #tpu.pipeline_mode<synchronous>, transform_indices = @transform_3, window_bounds = array<i64: 32, 128>}, {pipeline_mode = #tpu.pipeline_mode<synchronous>, transform_indices = @transform_4, window_bounds = array<i64: 1, 128>}, {pipeline_mode = #tpu.pipeline_mode<synchronous>, transform_indices = @transform_5, window_bounds = array<i64: 640, 128>}, {pipeline_mode = #tpu.pipeline_mode<synchronous>, transform_indices = @transform_6, window_bounds = array<i64: 1, 128>}, {pipeline_mode = #tpu.pipeline_mode<synchronous>, transform_indices = @transform_7, window_bounds = array<i64: 128, 128>}, {pipeline_mode = #tpu.pipeline_mode<synchronous>, transform_indices = @transform_8, window_bounds = array<i64: 1, 128>}, {transform_indices = @transform_9, window_bounds = array<i64: 1, 16, 128>}]} {
    %c0 = arith.constant 0 : index
    %c0_0 = arith.constant 0 : index
    %c0_1 = arith.constant 0 : index
    %0 = vector.load %arg3[%c0, %c0_0, %c0_1] : memref<1x8x32xf32, #tpu.memory_space<vmem>>, vector<1x8x32xf32>
    %1 = vector.shape_cast %0 : vector<1x8x32xf32> to vector<8x32xf32>
    %2 = arith.truncf %1 : vector<8x32xf32> to vector<8x32xbf16>
    %c0_2 = arith.constant 0 : index
    %c0_3 = arith.constant 0 : index
    %c0_4 = arith.constant 0 : index
    %3 = vector.load %arg2[%c0_2, %c0_3, %c0_4] : memref<1x16x32xf32, #tpu.memory_space<vmem>>, vector<1x16x32xf32>
    %4 = vector.shape_cast %3 : vector<1x16x32xf32> to vector<16x32xf32>
    %5 = arith.truncf %4 : vector<16x32xf32> to vector<16x32xbf16>
    %c0_5 = arith.constant 0 : index
    %c0_6 = arith.constant 0 : index
    %c0_7 = arith.constant 0 : index
    %6 = vector.load %arg4[%c0_5, %c0_6, %c0_7] : memref<1x8x32xf32, #tpu.memory_space<vmem>>, vector<1x8x32xf32>
    %7 = vector.shape_cast %6 : vector<1x8x32xf32> to vector<8x32xf32>
    %8 = arith.truncf %7 : vector<8x32xf32> to vector<8x32xbf16>
    %9 = tpu.concatenate %2, %5, %8 in 0 : vector<8x32xbf16>, vector<16x32xbf16>, vector<8x32xbf16> -> vector<32x32xbf16>
    %c0_8 = arith.constant 0 : index
    %c0_9 = arith.constant 0 : index
    %10 = vector.load %arg5[%c0_8, %c0_9] : memref<32x128xbf16, #tpu.memory_space<vmem>>, vector<32x128xbf16>
    %cst = arith.constant dense<0.000000e+00> : vector<32x128xf32>
    %11 = tpu.matmul %9, %10, %cst {dimension_numbers = #tpu.dot_dimension_numbers<[1], [0], [0], [1], [0, 0, 1, 1], [], []>} : vector<32x32xbf16>, vector<32x128xbf16>, vector<32x128xf32> -> vector<32x128xf32>
    %c0_10 = arith.constant 0 : index
    %c0_11 = arith.constant 0 : index
    %12 = vector.load %arg6[%c0_10, %c0_11] : memref<1x128xf32, #tpu.memory_space<vmem>>, vector<1x128xf32>
    %13 = vector.broadcast %12 : vector<1x128xf32> to vector<32x128xf32>
    %14 = arith.addf %11, %13 : vector<32x128xf32>
    %cst_12 = arith.constant 0.000000e+00 : f32
    %15 = vector.broadcast %cst_12 : f32 to vector<32x128xf32>
    %16 = arith.maximumf %14, %15 : vector<32x128xf32>
    %17 = tpu.iota {dimensions = array<i32: 0>} : vector<32x1xi32>
    %c16_i32 = arith.constant 16 : i32
    %18 = arith.muli %arg1, %c16_i32 : i32
    %19 = vector.broadcast %18 : i32 to vector<32x1xi32>
    %20 = arith.addi %19, %17 : vector<32x1xi32>
    %c8_i32 = arith.constant 8 : i32
    %21 = vector.broadcast %c8_i32 : i32 to vector<32x1xi32>
    %22 = arith.subi %20, %21 : vector<32x1xi32>
    %c0_i32 = arith.constant 0 : i32
    %23 = vector.broadcast %c0_i32 : i32 to vector<32x1xi32>
    %24 = arith.cmpi sge, %22, %23 : vector<32x1xi32>
    %c16_i32_13 = arith.constant 16 : i32
    %25 = vector.broadcast %c16_i32_13 : i32 to vector<32x1xi32>
    %26 = arith.cmpi slt, %22, %25 : vector<32x1xi32>
    %27 = arith.andi %24, %26 : vector<32x1xi1>
    %cst_14 = arith.constant 0.000000e+00 : f32
    %28 = vector.shape_cast %27 : vector<32x1xi1> to vector<32x1xi1>
    %29 = vector.broadcast %28 : vector<32x1xi1> to vector<32x128xi1>
    %30 = vector.broadcast %cst_14 : f32 to vector<32x128xf32>
    %31 = arith.select %29, %16, %30 : vector<32x128xi1>, vector<32x128xf32>
    %32 = arith.truncf %31 : vector<32x128xf32> to vector<32x128xbf16>
    %33 = vector.extract_strided_slice %32 {offsets = [6, 0], sizes = [16, 128], strides = [1, 1]} : vector<32x128xbf16> to vector<16x128xbf16>
    %34 = vector.extract_strided_slice %32 {offsets = [7, 0], sizes = [16, 128], strides = [1, 1]} : vector<32x128xbf16> to vector<16x128xbf16>
    %35 = vector.extract_strided_slice %32 {offsets = [8, 0], sizes = [16, 128], strides = [1, 1]} : vector<32x128xbf16> to vector<16x128xbf16>
    %36 = vector.extract_strided_slice %32 {offsets = [9, 0], sizes = [16, 128], strides = [1, 1]} : vector<32x128xbf16> to vector<16x128xbf16>
    %37 = vector.extract_strided_slice %32 {offsets = [10, 0], sizes = [16, 128], strides = [1, 1]} : vector<32x128xbf16> to vector<16x128xbf16>
    %38 = tpu.concatenate %33, %34, %35, %36, %37 in 1 : vector<16x128xbf16>, vector<16x128xbf16>, vector<16x128xbf16>, vector<16x128xbf16>, vector<16x128xbf16> -> vector<16x640xbf16>
    %c0_15 = arith.constant 0 : index
    %c0_16 = arith.constant 0 : index
    %39 = vector.load %arg7[%c0_15, %c0_16] : memref<640x128xbf16, #tpu.memory_space<vmem>>, vector<640x128xbf16>
    %cst_17 = arith.constant dense<0.000000e+00> : vector<16x128xf32>
    %40 = tpu.matmul %38, %39, %cst_17 {dimension_numbers = #tpu.dot_dimension_numbers<[1], [0], [0], [1], [0, 0, 1, 1], [], []>} : vector<16x640xbf16>, vector<640x128xbf16>, vector<16x128xf32> -> vector<16x128xf32>
    %c0_18 = arith.constant 0 : index
    %c0_19 = arith.constant 0 : index
    %41 = vector.load %arg8[%c0_18, %c0_19] : memref<1x128xf32, #tpu.memory_space<vmem>>, vector<1x128xf32>
    %42 = vector.broadcast %41 : vector<1x128xf32> to vector<16x128xf32>
    %43 = arith.addf %40, %42 : vector<16x128xf32>
    %cst_20 = arith.constant 0.000000e+00 : f32
    %44 = vector.broadcast %cst_20 : f32 to vector<16x128xf32>
    %45 = arith.maximumf %43, %44 : vector<16x128xf32>
    %46 = arith.truncf %45 : vector<16x128xf32> to vector<16x128xbf16>
    %c0_21 = arith.constant 0 : index
    %c0_22 = arith.constant 0 : index
    %47 = vector.load %arg9[%c0_21, %c0_22] : memref<128x128xbf16, #tpu.memory_space<vmem>>, vector<128x128xbf16>
    %cst_23 = arith.constant dense<0.000000e+00> : vector<16x128xf32>
    %48 = tpu.matmul %46, %47, %cst_23 {dimension_numbers = #tpu.dot_dimension_numbers<[1], [0], [0], [1], [0, 0, 1, 1], [], []>} : vector<16x128xbf16>, vector<128x128xbf16>, vector<16x128xf32> -> vector<16x128xf32>
    %c0_24 = arith.constant 0 : index
    %c0_25 = arith.constant 0 : index
    %49 = vector.load %arg10[%c0_24, %c0_25] : memref<1x128xf32, #tpu.memory_space<vmem>>, vector<1x128xf32>
    %50 = vector.broadcast %49 : vector<1x128xf32> to vector<16x128xf32>
    %51 = arith.addf %48, %50 : vector<16x128xf32>
    %c0_26 = arith.constant 0 : index
    %c0_27 = arith.constant 0 : index
    %c0_28 = arith.constant 0 : index
    %52 = vector.load %arg11[%c0_26, %c0_27, %c0_28] : memref<1x16x128xf32, #tpu.memory_space<vmem>>, vector<1x16x128xf32>
    %53 = vector.shape_cast %52 : vector<1x16x128xf32> to vector<16x128xf32>
    %54 = vector.shape_cast %51 : vector<16x128xf32> to vector<1x16x128xf32>
    tpu.vector_store %arg11[%c0_26, %c0_27, %c0_28], %54 {strides = array<i32>} : memref<1x16x128xf32, #tpu.memory_space<vmem>>, vector<1x16x128xf32>,
    return
  }
  func.func @transform_0(%arg0: i32, %arg1: i32) -> (i32, i32, i32) {
    %c0_i32 = arith.constant 0 : i32
    %c0_i32_0 = arith.constant 0 : i32
    return %arg0, %arg1, %c0_i32 : i32, i32, i32
  }
  func.func @transform_1(%arg0: i32, %arg1: i32) -> (i32, i32, i32) {
    %c2_i32 = arith.constant 2 : i32
    %0 = arith.muli %arg1, %c2_i32 : i32
    %c1_i32 = arith.constant 1 : i32
    %1 = arith.subi %0, %c1_i32 : i32
    %c0_i32 = arith.constant 0 : i32
    %2 = arith.maxsi %1, %c0_i32 : i32
    %c0_i32_0 = arith.constant 0 : i32
    %c0_i32_1 = arith.constant 0 : i32
    return %arg0, %2, %c0_i32_0 : i32, i32, i32
  }
  func.func @transform_2(%arg0: i32, %arg1: i32) -> (i32, i32, i32) {
    %c1_i32 = arith.constant 1 : i32
    %0 = arith.addi %arg1, %c1_i32 : i32
    %c2_i32 = arith.constant 2 : i32
    %1 = arith.muli %0, %c2_i32 : i32
    %c1_i32_0 = arith.constant 1 : i32
    %2 = arith.minsi %1, %c1_i32_0 : i32
    %c0_i32 = arith.constant 0 : i32
    %c0_i32_1 = arith.constant 0 : i32
    return %arg0, %2, %c0_i32 : i32, i32, i32
  }
  func.func @transform_3(%arg0: i32, %arg1: i32) -> (i32, i32) {
    %c0_i32 = arith.constant 0 : i32
    %c0_i32_0 = arith.constant 0 : i32
    %c0_i32_1 = arith.constant 0 : i32
    return %c0_i32, %c0_i32_0 : i32, i32
  }
  func.func @transform_4(%arg0: i32, %arg1: i32) -> (i32, i32) {
    %c0_i32 = arith.constant 0 : i32
    %c0_i32_0 = arith.constant 0 : i32
    %c0_i32_1 = arith.constant 0 : i32
    return %c0_i32, %c0_i32_0 : i32, i32
  }
  func.func @transform_5(%arg0: i32, %arg1: i32) -> (i32, i32) {
    %c0_i32 = arith.constant 0 : i32
    %c0_i32_0 = arith.constant 0 : i32
    %c0_i32_1 = arith.constant 0 : i32
    return %c0_i32, %c0_i32_0 : i32, i32
  }
  func.func @transform_6(%arg0: i32, %arg1: i32) -> (i32, i32) {
    %c0_i32 = arith.constant 0 : i32
    %c0_i32_0 = arith.constant 0 : i32
    %c0_i32_1 = arith.constant 0 : i32
    return %c0_i32, %c0_i32_0 : i32, i32
  }
  func.func @transform_7(%arg0: i32, %arg1: i32) -> (i32, i32) {
    %c0_i32 = arith.constant 0 : i32
    %c0_i32_0 = arith.constant 0 : i32
    %c0_i32_1 = arith.constant 0 : i32
    return %c0_i32, %c0_i32_0 : i32, i32
  }
  func.func @transform_8(%arg0: i32, %arg1: i32) -> (i32, i32) {
    %c0_i32 = arith.constant 0 : i32
    %c0_i32_0 = arith.constant 0 : i32
    %c0_i32_1 = arith.constant 0 : i32
    return %c0_i32, %c0_i32_0 : i32, i32
  }
  func.func @transform_9(%arg0: i32, %arg1: i32) -> (i32, i32, i32) {
    %c0_i32 = arith.constant 0 : i32
    %c0_i32_0 = arith.constant 0 : i32
    return %arg0, %arg1, %c0_i32 : i32, i32, i32
  }
}

</mosaic_0001>

<llo_original>
// kernel: tpu_custom_call.1
$region0: #{tpu_custom_call.1}
  #allocation0 [shape = 'u32[]', space=smem, size = 0x4, offset = 0x4, fixed_abs, tag = 'smem constant byte address 0x4 - core index']
  #allocation1 [shape = 'u32[144,128]{1,0:T(1,128)}', space=vmem, size = 0x12000, scoped, tag = 'internal scratch']
  %s0 = inlined_call_operand.hbm [shape: f32[2,16,32], index: 0, kind: input, shape index: {}]
  %s1 = inlined_call_operand.hbm [shape: f32[2,16,32], index: 1, kind: input, shape index: {}]
  %s2 = inlined_call_operand.hbm [shape: f32[2,16,32], index: 2, kind: input, shape index: {}]
  %s3 = inlined_call_operand.hbm [shape: bf16[32,128], index: 3, kind: input, shape index: {}]
  %s4 = inlined_call_operand.vmem [shape: f32[1,128], index: 4, kind: input, shape index: {}]
  %s5 = inlined_call_operand.hbm [shape: bf16[640,128], index: 5, kind: input, shape index: {}]
  %s6 = inlined_call_operand.vmem [shape: f32[1,128], index: 6, kind: input, shape index: {}]
  %s7 = inlined_call_operand.hbm [shape: bf16[128,128], index: 7, kind: input, shape index: {}]
  %s8 = inlined_call_operand.vmem [shape: f32[1,128], index: 8, kind: input, shape index: {}]
  %s9 = inlined_call_operand.hbm [shape: f32[2,16,128], index: 9, kind: output, shape index: {}]
  %s10 = sld [smem:[#allocation0]]
  $region93: #{tpu_custom_call.1} parent=0
    _
  %s12 = ssub.s32 1, %s10
  %s13 = scalar_select 0, %s12, %s10
  $region1: #{tpu_custom_call.1} parent=0
    #allocation2 [shape = 'u8[16384]{0}', space=vmem, size = 0x4000, scoped, tag = 'input window, operand 0']
    #allocation3 [shape = 's32[2]{0}', space=sflag, size = 0x8, scoped, tag = 'scoped memory for tpu_custom_call.1']
    #allocation4 [shape = 's32[2]{0}', space=sflag, size = 0x8, scoped, tag = 'scoped memory for tpu_custom_call.1']
    #allocation5 [shape = 'u8[8192]{0}', space=vmem, size = 0x2000, scoped, tag = 'input window, operand 1']
    #allocation6 [shape = 's32[2]{0}', space=sflag, size = 0x8, scoped, tag = 'scoped memory for tpu_custom_call.1']
    #allocation7 [shape = 'u8[8192]{0}', space=vmem, size = 0x2000, scoped, tag = 'input window, operand 2']
    #allocation8 [shape = 'u8[8192]{0}', space=vmem, size = 0x2000, scoped, tag = 'input window, operand 3, single buffered']
    #allocation9 [shape = 's32[1]{0}', space=sflag, size = 0x4, scoped, tag = 'scoped memory for tpu_custom_call.1']
    #allocation10 [shape = 'u8[163840]{0}', space=vmem, size = 0x28000, scoped, tag = 'input window, operand 5, single buffered']
    #allocation11 [shape = 'u8[32768]{0}', space=vmem, size = 0x8000, scoped, tag = 'input window, operand 7, single buffered']
    #allocation12 [shape = 's32[1]{0}', space=sflag, size = 0x4, scoped, tag = 'scoped memory for tpu_custom_call.1']
    #allocation13 [shape = 'u8[16384]{0}', space=vmem, size = 0x4000, scoped, tag = 'output window, operand 0']
    %14 = vsyncpa [#allocation3], 0
    %s15 = scalar_lea.sflag [#allocation3], 1
    %16 = vsyncpa %s15, 0
    %17 = vsyncpa [#allocation6], 0
    %s18 = scalar_lea.sflag [#allocation6], 1
    %19 = vsyncpa %s18, 0
    %20 = vsyncpa [#allocation9], 0
    %21 = vsyncpa [#allocation12], 0
    %22 = vsyncpa [#allocation4], 0
    %s23 = scalar_lea.sflag [#allocation4], 1
    %24 = vsyncpa %s23, 0
    loop: start=0, step=1, limit=4
    $region2: #{tpu_custom_call.1} parent=1 // loop_pre_header
      _
    $region3: #{tpu_custom_call.1} parent=1 // loop_header
      %s26 = sphi 0, %s30
      %p27 = scmp.ge.s32.totalorder %s26, 4
      %s33 = sphi 0, %s45
      %s34 = sphi 0, %s41
      %s35 = sphi 0, %s33
      %s36 = sphi 0, %s34
      %s37 = sphi 0, %s35
      %s38 = sphi 0, %s36
      %s50 = sphi 0, %s52
      %s53 = sphi 0, %s50
      %s54 = sphi 0, %s53
      %s70 = sphi 0, %s54
      %s86 = sphi 0, %s88
      %s89 = sphi 0, %s86
      %s90 = sphi 0, %s89
      %s106 = sphi 0, %s90
      %s122 = sphi 0, %s124
      %s125 = sphi 0, %s122
      %s126 = sphi 0, %s125
      %s142 = sphi 0, %s126
      %s146 = sphi 0, %s146
      %s148 = sphi 0, %s146
      %s149 = sphi 0, %s148
      %s163 = sphi 0, %s149
      %s167 = sphi 0, %s167
      %s169 = sphi 0, %s167
      %s170 = sphi 0, %s169
      %s184 = sphi 0, %s170
      %s188 = sphi 0, %s188
      %s190 = sphi 0, %s188
      %s191 = sphi 0, %s190
      %s205 = sphi 0, %s191
      %s209 = sphi 0, %s209
      %s211 = sphi 0, %s209
      %s212 = sphi 0, %s211
      %s226 = sphi 0, %s212
      %s230 = sphi 0, %s230
      %s232 = sphi 0, %s230
      %s233 = sphi 0, %s232
      %s247 = sphi 0, %s233
      %s251 = sphi 0, %s251
      %s253 = sphi 0, %s251
      %s254 = sphi 0, %s253
      %s268 = sphi 0, %s254
      %s276 = sphi 0, %s278
      %s279 = sphi 0, %s276
      %s280 = sphi 0, %s279
      %s296 = sphi 0, %s280
    $region4: #{tpu_custom_call.1} parent=1 // loop_header_branch
      %29 = sbr.rel (%p27) target = $region8
    $region5: #{tpu_custom_call.1} parent=1 // loop_body
      %s31 = ssub.s32 %s26, 1
      %s32 = ssub.s32 %s26, 2
      %s39 = sadd.s32 1, %s34
      %p40 = scmp.ge.s32.totalorder %s39, 1
      %s41 = scalar_select %p40, 0, %s39
      %s42 = sadd.s32 1, %s33
      %s43 = scalar_select %p40, %s42, %s33
      %p44 = scmp.ge.s32.totalorder %s43, 2
      %s45 = scalar_select %p44, 0, %s43
      %s46 = ssub.s32 %s33, %s45
      %s47 = ssub.s32 %s34, %s41
      %s48 = sor.u32 %s46, %s47
      %p49 = scmp.eq.s32.totalorder %s48, 0
      %s51 = sadd.s32 %s50, 1
      %s52 = scalar_select %p49, %s50, %s51
      %p55 = pneg %p49
      %p56 = scmp.eq.s32.totalorder %s26, 1
      %p57 = por %p55, %p56
      %p58 = scmp.ne.s32.totalorder %s50, %s53
      %p59 = scmp.eq.s32.totalorder %s26, 0
      %p60 = por %p58, %p59
      %p61 = scmp.ne.s32.totalorder %s50, %s53
      %p62 = scmp.eq.s32.totalorder %s31, 1
      %p63 = por %p61, %p62
      %p64 = scmp.ne.s32.totalorder %s53, %s54
      %p65 = scmp.eq.s32.totalorder %s31, 0
      %p66 = por %p64, %p65
      %p67 = scmp.ne.s32.totalorder %s53, %s54
      %p68 = scmp.eq.s32.totalorder %s32, 1
      %p69 = por %p67, %p68
      %p71 = scmp.ne.s32.totalorder %s54, %s70
      %p72 = scmp.eq.s32.totalorder %s32, 0
      %p73 = por %p71, %p72
      %s74 = smul.u32 %s34, 2
      %s75 = ssub.s32 %s74, 1
      %p76 = scmp.gt.s32.totalorder %s75, 0
      %s77 = scalar_select %p76, %s75, 0
      %s78 = smul.u32 %s41, 2
      %s79 = ssub.s32 %s78, 1
      %p80 = scmp.gt.s32.totalorder %s79, 0
      %s81 = scalar_select %p80, %s79, 0
      %s82 = ssub.s32 %s33, %s45
      %s83 = ssub.s32 %s77, %s81
      %s84 = sor.u32 %s82, %s83
      %p85 = scmp.eq.s32.totalorder %s84, 0
      %s87 = sadd.s32 %s86, 1
      %s88 = scalar_select %p85, %s86, %s87
      %p91 = pneg %p85
      %p92 = scmp.eq.s32.totalorder %s26, 1
      %p93 = por %p91, %p92
      %p94 = scmp.ne.s32.totalorder %s86, %s89
      %p95 = scmp.eq.s32.totalorder %s26, 0
      %p96 = por %p94, %p95
      %p97 = scmp.ne.s32.totalorder %s86, %s89
      %p98 = scmp.eq.s32.totalorder %s31, 1
      %p99 = por %p97, %p98
      %p100 = scmp.ne.s32.totalorder %s89, %s90
      %p101 = scmp.eq.s32.totalorder %s31, 0
      %p102 = por %p100, %p101
      %p103 = scmp.ne.s32.totalorder %s89, %s90
      %p104 = scmp.eq.s32.totalorder %s32, 1
      %p105 = por %p103, %p104
      %p107 = scmp.ne.s32.totalorder %s90, %s106
      %p108 = scmp.eq.s32.totalorder %s32, 0
      %p109 = por %p107, %p108
      %s110 = sadd.s32 %s34, 1
      %s111 = smul.u32 %s110, 2
      %p112 = scmp.lt.s32.totalorder %s111, 1
      %s113 = scalar_select %p112, %s111, 1
      %s114 = sadd.s32 %s41, 1
      %s115 = smul.u32 %s114, 2
      %p116 = scmp.lt.s32.totalorder %s115, 1
      %s117 = scalar_select %p116, %s115, 1
      %s118 = ssub.s32 %s33, %s45
      %s119 = ssub.s32 %s113, %s117
      %s120 = sor.u32 %s118, %s119
      %p121 = scmp.eq.s32.totalorder %s120, 0
      %s123 = sadd.s32 %s122, 1
      %s124 = scalar_select %p121, %s122, %s123
      %p127 = pneg %p121
      %p128 = scmp.eq.s32.totalorder %s26, 1
      %p129 = por %p127, %p128
      %p130 = scmp.ne.s32.totalorder %s122, %s125
      %p131 = scmp.eq.s32.totalorder %s26, 0
      %p132 = por %p130, %p131
      %p133 = scmp.ne.s32.totalorder %s122, %s125
      %p134 = scmp.eq.s32.totalorder %s31, 1
      %p135 = por %p133, %p134
      %p136 = scmp.ne.s32.totalorder %s125, %s126
      %p137 = scmp.eq.s32.totalorder %s31, 0
      %p138 = por %p136, %p137
      %p139 = scmp.ne.s32.totalorder %s125, %s126
      %p140 = scmp.eq.s32.totalorder %s32, 1
      %p141 = por %p139, %p140
      %p143 = scmp.ne.s32.totalorder %s126, %s142
      %p144 = scmp.eq.s32.totalorder %s32, 0
      %p145 = por %p143, %p144
      %s147 = sadd.s32 %s146, 1
      %p150 = scmp.eq.s32.totalorder %s26, 1
      %p151 = scmp.ne.s32.totalorder %s146, %s148
      %p152 = scmp.eq.s32.totalorder %s26, 0
      %p153 = por %p151, %p152
      %p154 = scmp.ne.s32.totalorder %s146, %s148
      %p155 = scmp.eq.s32.totalorder %s31, 1
      %p156 = por %p154, %p155
      %p157 = scmp.ne.s32.totalorder %s148, %s149
      %p158 = scmp.eq.s32.totalorder %s31, 0
      %p159 = por %p157, %p158
      %p160 = scmp.ne.s32.totalorder %s148, %s149
      %p161 = scmp.eq.s32.totalorder %s32, 1
      %p162 = por %p160, %p161
      %p164 = scmp.ne.s32.totalorder %s149, %s163
      %p165 = scmp.eq.s32.totalorder %s32, 0
      %p166 = por %p164, %p165
      %s168 = sadd.s32 %s167, 1
      %p171 = scmp.eq.s32.totalorder %s26, 1
      %p172 = scmp.ne.s32.totalorder %s167, %s169
      %p173 = scmp.eq.s32.totalorder %s26, 0
      %p174 = por %p172, %p173
      %p175 = scmp.ne.s32.totalorder %s167, %s169
      %p176 = scmp.eq.s32.totalorder %s31, 1
      %p177 = por %p175, %p176
      %p178 = scmp.ne.s32.totalorder %s169, %s170
      %p179 = scmp.eq.s32.totalorder %s31, 0
      %p180 = por %p178, %p179
      %p181 = scmp.ne.s32.totalorder %s169, %s170
      %p182 = scmp.eq.s32.totalorder %s32, 1
      %p183 = por %p181, %p182
      %p185 = scmp.ne.s32.totalorder %s170, %s184
      %p186 = scmp.eq.s32.totalorder %s32, 0
      %p187 = por %p185, %p186
      %s189 = sadd.s32 %s188, 1
      %p192 = scmp.eq.s32.totalorder %s26, 1
      %p193 = scmp.ne.s32.totalorder %s188, %s190
      %p194 = scmp.eq.s32.totalorder %s26, 0
      %p195 = por %p193, %p194
      %p196 = scmp.ne.s32.totalorder %s188, %s190
      %p197 = scmp.eq.s32.totalorder %s31, 1
      %p198 = por %p196, %p197
      %p199 = scmp.ne.s32.totalorder %s190, %s191
      %p200 = scmp.eq.s32.totalorder %s31, 0
      %p201 = por %p199, %p200
      %p202 = scmp.ne.s32.totalorder %s190, %s191
      %p203 = scmp.eq.s32.totalorder %s32, 1
      %p204 = por %p202, %p203
      %p206 = scmp.ne.s32.totalorder %s191, %s205
      %p207 = scmp.eq.s32.totalorder %s32, 0
      %p208 = por %p206, %p207
      %s210 = sadd.s32 %s209, 1
      %p213 = scmp.eq.s32.totalorder %s26, 1
      %p214 = scmp.ne.s32.totalorder %s209, %s211
      %p215 = scmp.eq.s32.totalorder %s26, 0
      %p216 = por %p214, %p215
      %p217 = scmp.ne.s32.totalorder %s209, %s211
      %p218 = scmp.eq.s32.totalorder %s31, 1
      %p219 = por %p217, %p218
      %p220 = scmp.ne.s32.totalorder %s211, %s212
      %p221 = scmp.eq.s32.totalorder %s31, 0
      %p222 = por %p220, %p221
      %p223 = scmp.ne.s32.totalorder %s211, %s212
      %p224 = scmp.eq.s32.totalorder %s32, 1
      %p225 = por %p223, %p224
      %p227 = scmp.ne.s32.totalorder %s212, %s226
      %p228 = scmp.eq.s32.totalorder %s32, 0
      %p229 = por %p227, %p228
      %s231 = sadd.s32 %s230, 1
      %p234 = scmp.eq.s32.totalorder %s26, 1
      %p235 = scmp.ne.s32.totalorder %s230, %s232
      %p236 = scmp.eq.s32.totalorder %s26, 0
      %p237 = por %p235, %p236
      %p238 = scmp.ne.s32.totalorder %s230, %s232
      %p239 = scmp.eq.s32.totalorder %s31, 1
      %p240 = por %p238, %p239
      %p241 = scmp.ne.s32.totalorder %s232, %s233
      %p242 = scmp.eq.s32.totalorder %s31, 0
      %p243 = por %p241, %p242
      %p244 = scmp.ne.s32.totalorder %s232, %s233
      %p245 = scmp.eq.s32.totalorder %s32, 1
      %p246 = por %p244, %p245
      %p248 = scmp.ne.s32.totalorder %s233, %s247
      %p249 = scmp.eq.s32.totalorder %s32, 0
      %p250 = por %p248, %p249
      %s252 = sadd.s32 %s251, 1
      %p255 = scmp.eq.s32.totalorder %s26, 1
      %p256 = scmp.ne.s32.totalorder %s251, %s253
      %p257 = scmp.eq.s32.totalorder %s26, 0
      %p258 = por %p256, %p257
      %p259 = scmp.ne.s32.totalorder %s251, %s253
      %p260 = scmp.eq.s32.totalorder %s31, 1
      %p261 = por %p259, %p260
      %p262 = scmp.ne.s32.totalorder %s253, %s254
      %p263 = scmp.eq.s32.totalorder %s31, 0
      %p264 = por %p262, %p263
      %p265 = scmp.ne.s32.totalorder %s253, %s254
      %p266 = scmp.eq.s32.totalorder %s32, 1
      %p267 = por %p265, %p266
      %p269 = scmp.ne.s32.totalorder %s254, %s268
      %p270 = scmp.eq.s32.totalorder %s32, 0
      %p271 = por %p269, %p270
      %s272 = ssub.s32 %s33, %s45
      %s273 = ssub.s32 %s34, %s41
      %s274 = sor.u32 %s272, %s273
      %p275 = scmp.eq.s32.totalorder %s274, 0
      %s277 = sadd.s32 %s276, 1
      %s278 = scalar_select %p275, %s276, %s277
      %p281 = pneg %p275
      %p282 = scmp.eq.s32.totalorder %s26, 1
      %p283 = por %p281, %p282
      %p284 = scmp.ne.s32.totalorder %s276, %s279
      %p285 = scmp.eq.s32.totalorder %s26, 0
      %p286 = por %p284, %p285
      %p287 = scmp.ne.s32.totalorder %s276, %s279
      %p288 = scmp.eq.s32.totalorder %s31, 1
      %p289 = por %p287, %p288
      %p290 = scmp.ne.s32.totalorder %s279, %s280
      %p291 = scmp.eq.s32.totalorder %s31, 0
      %p292 = por %p290, %p291
      %p293 = scmp.ne.s32.totalorder %s279, %s280
      %p294 = scmp.eq.s32.totalorder %s32, 1
      %p295 = por %p293, %p294
      %p297 = scmp.ne.s32.totalorder %s280, %s296
      %p298 = scmp.eq.s32.totalorder %s32, 0
      %p299 = por %p297, %p298
      %p300 = scmp.le.s32.totalorder 1, %s26
      %p301 = scmp.lt.s32.totalorder %s26, 3
      %p302 = pnand %p300, %p301
      %p303 = pneg %p302
      // Predicated region
      $region9: #{tpu_custom_call.1} parent=5 // pred_check
        _
      $region10: #{tpu_custom_call.1} parent=5 // pred_check_branch
        %305 = sbr.rel (%p302) target = $region12
      $region11: #{tpu_custom_call.1} parent=5 // pred_region
        %s306 = ssub.s32 %s26, 1
        // Predicated region
        $region13: #{tpu_custom_call.1} parent=11 // pred_check
          %p307 = pneg %p159
        $region14: #{tpu_custom_call.1} parent=11 // pred_check_branch
          %309 = sbr.rel (%p307) target = $region16
        $region15: #{tpu_custom_call.1} parent=11 // pred_region
          %s311 = ssub.s32 256, 256
          %312 = vsyncadd [#allocation9], %s311
          %s313 = sshll.u32 [#allocation8], 4
          %s314 = int_to_ptr.vmem [resolvable:$true] %s313
          %319 = dma.hbm_to_vmem [thread:$0]  %s3, 256, %s314, [#allocation9], 64, 64, 4
        $region16: #{tpu_custom_call.1} parent=11 // pred_fallthru
          _
        // Predicated region
        $region17: #{tpu_custom_call.1} parent=11 // pred_check
          %p320 = pneg %p180
        $region18: #{tpu_custom_call.1} parent=11 // pred_check_branch
          %322 = sbr.rel (%p320) target = $region20
        $region19: #{tpu_custom_call.1} parent=11 // pred_region
          _
        $region20: #{tpu_custom_call.1} parent=11 // pred_fallthru
          _
        // Predicated region
        $region21: #{tpu_custom_call.1} parent=11 // pred_check
          %p323 = pneg %p201
        $region22: #{tpu_custom_call.1} parent=11 // pred_check_branch
          %325 = sbr.rel (%p323) target = $region24
        $region23: #{tpu_custom_call.1} parent=11 // pred_region
          %s327 = ssub.s32 5120, 5120
          %328 = vsyncadd [#allocation9], %s327
          %s329 = sshll.u32 [#allocation10], 4
          %s330 = int_to_ptr.vmem [resolvable:$true] %s329
          %335 = dma.hbm_to_vmem [thread:$0]  %s5, 5120, %s330, [#allocation9], 64, 64, 4
        $region24: #{tpu_custom_call.1} parent=11 // pred_fallthru
          _
        // Predicated region
        $region25: #{tpu_custom_call.1} parent=11 // pred_check
          %p336 = pneg %p222
        $region26: #{tpu_custom_call.1} parent=11 // pred_check_branch
          %338 = sbr.rel (%p336) target = $region28
        $region27: #{tpu_custom_call.1} parent=11 // pred_region
          _
        $region28: #{tpu_custom_call.1} parent=11 // pred_fallthru
          _
        // Predicated region
        $region29: #{tpu_custom_call.1} parent=11 // pred_check
          %p339 = pneg %p243
        $region30: #{tpu_custom_call.1} parent=11 // pred_check_branch
          %341 = sbr.rel (%p339) target = $region32
        $region31: #{tpu_custom_call.1} parent=11 // pred_region
          %s343 = ssub.s32 1024, 1024
          %344 = vsyncadd [#allocation12], %s343
          %s345 = sshll.u32 [#allocation11], 4
          %s346 = int_to_ptr.vmem [resolvable:$true] %s345
          %351 = dma.hbm_to_vmem [thread:$0]  %s7, 1024, %s346, [#allocation12], 64, 64, 4
        $region32: #{tpu_custom_call.1} parent=11 // pred_fallthru
          _
        // Predicated region
        $region33: #{tpu_custom_call.1} parent=11 // pred_check
          %p352 = pneg %p264
        $region34: #{tpu_custom_call.1} parent=11 // pred_check_branch
          %354 = sbr.rel (%p352) target = $region36
        $region35: #{tpu_custom_call.1} parent=11 // pred_region
          _
        $region36: #{tpu_custom_call.1} parent=11 // pred_fallthru
          _
      $region12: #{tpu_custom_call.1} parent=5 // pred_fallthru
        _
      %p355 = scmp.lt.s32.totalorder %s26, 2
      // Predicated region
      $region37: #{tpu_custom_call.1} parent=5 // pred_check
        %p356 = pneg %p355
      $region38: #{tpu_custom_call.1} parent=5 // pred_check_branch
        %358 = sbr.rel (%p356) target = $region40
      $region39: #{tpu_custom_call.1} parent=5 // pred_region
        // Predicated region
        $region41: #{tpu_custom_call.1} parent=39 // pred_check
          %p359 = pneg %p60
        $region42: #{tpu_custom_call.1} parent=39 // pred_check_branch
          %361 = sbr.rel (%p359) target = $region44
        $region43: #{tpu_custom_call.1} parent=39 // pred_region
          %s362 = sand.u32 %s50, 1
          %s363 = scalar_lea.sflag [#allocation3], %s362
          %s364 = sand.u32 %s50, 1
          %s365 = smul.addr %s364, 16
          %s366 = scalar_lea.vmem [#allocation2], %s365
          %s367 = smul.u32 2, %s34
          %s369 = ssub.s32 256, 256
          %370 = vsyncadd %s363, %s369
          %s371 = smul.addr %s33, 2
          %s372 = sadd.s32 %s367, %s371
          %s373 = smul.addr %s372, 128
          %s374 = scalar_lea.hbm %s0, %s373
          %s375 = sshll.u32 %s366, 4
          %s376 = int_to_ptr.vmem [resolvable:$true] %s375
          %381 = dma.hbm_to_vmem [thread:$0]  %s374, 256, %s376, %s363, 128, 128, 8
        $region44: #{tpu_custom_call.1} parent=39 // pred_fallthru
          _
        // Predicated region
        $region45: #{tpu_custom_call.1} parent=39 // pred_check
          %p382 = pneg %p96
        $region46: #{tpu_custom_call.1} parent=39 // pred_check_branch
          %384 = sbr.rel (%p382) target = $region48
        $region47: #{tpu_custom_call.1} parent=39 // pred_region
          %s385 = sand.u32 %s26, 1
          %s386 = scalar_lea.sflag [#allocation6], %s385
          %s387 = sand.u32 %s86, 1
          %s388 = smul.addr %s387, 8
          %s389 = scalar_lea.vmem [#allocation5], %s388
          %s390 = smul.u32 %s34, 2
          %s391 = ssub.s32 %s390, 1
          %p392 = scmp.gt.s32.totalorder %s391, 0
          %s393 = scalar_select %p392, %s391, 0
          %s395 = ssub.s32 128, 128
          %396 = vsyncadd %s386, %s395
          %s397 = smul.addr %s33, 2
          %s398 = sadd.s32 %s393, %s397
          %s399 = smul.addr %s398, 128
          %s400 = scalar_lea.hbm %s1, %s399
          %s402 = sshll.u32 %s389, 4
          %s403 = int_to_ptr.vmem [resolvable:$true] %s402
          %405 = dma.hbm_to_vmem [thread:$0]  %s400, 128, %s403, %s386
        $region48: #{tpu_custom_call.1} parent=39 // pred_fallthru
          _
        // Predicated region
        $region49: #{tpu_custom_call.1} parent=39 // pred_check
          %p406 = pneg %p132
        $region50: #{tpu_custom_call.1} parent=39 // pred_check_branch
          %408 = sbr.rel (%p406) target = $region52
        $region51: #{tpu_custom_call.1} parent=39 // pred_region
          %s409 = sand.u32 %s26, 1
          %s410 = scalar_lea.sflag [#allocation6], %s409
          %s411 = sand.u32 %s122, 1
          %s412 = smul.addr %s411, 8
          %s413 = scalar_lea.vmem [#allocation7], %s412
          %s414 = sadd.s32 %s34, 1
          %s415 = smul.u32 %s414, 2
          %p416 = scmp.lt.s32.totalorder %s415, 1
          %s417 = scalar_select %p416, %s415, 1
          %s419 = ssub.s32 128, 128
          %420 = vsyncadd %s410, %s419
          %s421 = smul.addr %s33, 2
          %s422 = sadd.s32 %s417, %s421
          %s423 = smul.addr %s422, 128
          %s424 = scalar_lea.hbm %s2, %s423
          %s426 = sshll.u32 %s413, 4
          %s427 = int_to_ptr.vmem [resolvable:$true] %s426
          %429 = dma.hbm_to_vmem [thread:$0]  %s424, 128, %s427, %s410
        $region52: #{tpu_custom_call.1} parent=39 // pred_fallthru
          _
      $region40: #{tpu_custom_call.1} parent=5 // pred_fallthru
        _
      %p430 = scmp.le.s32.totalorder 1, %s26
      %p431 = scmp.lt.s32.totalorder %s26, 3
      %p432 = pnand %p430, %p431
      %p433 = pneg %p432
      // Predicated region
      $region53: #{tpu_custom_call.1} parent=5 // pred_check
        _
      $region54: #{tpu_custom_call.1} parent=5 // pred_check_branch
        %435 = sbr.rel (%p432) target = $region56
      $region55: #{tpu_custom_call.1} parent=5 // pred_region
        %s436 = ssub.s32 %s26, 1
        %s437 = sand.u32 %s53, 1
        %s438 = scalar_lea.sflag [#allocation3], %s437
        %s439 = sand.u32 %s53, 1
        %s440 = smul.addr %s439, 16
        %s441 = scalar_lea.vmem [#allocation2], %s440
        // Predicated region
        $region57: #{tpu_custom_call.1} parent=55 // pred_check
          %p442 = pneg %p66
        $region58: #{tpu_custom_call.1} parent=55 // pred_check_branch
          %444 = sbr.rel (%p442) target = $region60
        $region59: #{tpu_custom_call.1} parent=55 // pred_region
          %445 = dma.done %s438, 256
        $region60: #{tpu_custom_call.1} parent=55 // pred_fallthru
          _
        %s446 = sand.u32 %s31, 1
        %s447 = scalar_lea.sflag [#allocation6], %s446
        %s448 = sand.u32 %s89, 1
        %s449 = smul.addr %s448, 8
        %s450 = scalar_lea.vmem [#allocation5], %s449
        // Predicated region
        $region61: #{tpu_custom_call.1} parent=55 // pred_check
          %p451 = pneg %p102
        $region62: #{tpu_custom_call.1} parent=55 // pred_check_branch
          %453 = sbr.rel (%p451) target = $region64
        $region63: #{tpu_custom_call.1} parent=55 // pred_region
          %454 = dma.done %s447, 128
        $region64: #{tpu_custom_call.1} parent=55 // pred_fallthru
          _
        %s455 = sand.u32 %s31, 1
        %s456 = scalar_lea.sflag [#allocation6], %s455
        %s457 = sand.u32 %s125, 1
        %s458 = smul.addr %s457, 8
        %s459 = scalar_lea.vmem [#allocation7], %s458
        // Predicated region
        $region65: #{tpu_custom_call.1} parent=55 // pred_check
          %p460 = pneg %p138
        $region66: #{tpu_custom_call.1} parent=55 // pred_check_branch
          %462 = sbr.rel (%p460) target = $region68
        $region67: #{tpu_custom_call.1} parent=55 // pred_region
          %463 = dma.done %s456, 128
        $region68: #{tpu_custom_call.1} parent=55 // pred_fallthru
          _
        // Predicated region
        $region69: #{tpu_custom_call.1} parent=55 // pred_check
          %p464 = pneg %p159
        $region70: #{tpu_custom_call.1} parent=55 // pred_check_branch
          %466 = sbr.rel (%p464) target = $region72
        $region71: #{tpu_custom_call.1} parent=55 // pred_region
          %467 = dma.done [#allocation9], 256
        $region72: #{tpu_custom_call.1} parent=55 // pred_fallthru
          _
        // Predicated region
        $region73: #{tpu_custom_call.1} parent=55 // pred_check
          %p468 = pneg %p201
        $region74: #{tpu_custom_call.1} parent=55 // pred_check_branch
          %470 = sbr.rel (%p468) target = $region76
        $region75: #{tpu_custom_call.1} parent=55 // pred_region
          %471 = dma.done [#allocation9], 5120
        $region76: #{tpu_custom_call.1} parent=55 // pred_fallthru
          _
        // Predicated region
        $region77: #{tpu_custom_call.1} parent=55 // pred_check
          %p472 = pneg %p243
        $region78: #{tpu_custom_call.1} parent=55 // pred_check_branch
          %474 = sbr.rel (%p472) target = $region80
        $region79: #{tpu_custom_call.1} parent=55 // pred_region
          %475 = dma.done [#allocation12], 1024
        $region80: #{tpu_custom_call.1} parent=55 // pred_fallthru
          _
        %s476 = sand.u32 %s53, 1
        %s477 = scalar_lea.sflag [#allocation3], %s476
        %s478 = sand.u32 %s53, 1
        %s479 = smul.addr %s478, 16
        %s480 = scalar_lea.vmem [#allocation2], %s479
        %p481 = pneg %p66
        %p482 = pneg %p63
        %s483 = sand.u32 %s31, 1
        %s484 = scalar_lea.sflag [#allocation6], %s483
        %s485 = sand.u32 %s89, 1
        %s486 = smul.addr %s485, 8
        %s487 = scalar_lea.vmem [#allocation5], %s486
        %p488 = pneg %p102
        %p489 = pneg %p99
        %s490 = sand.u32 %s31, 1
        %s491 = scalar_lea.sflag [#allocation6], %s490
        %s492 = sand.u32 %s125, 1
        %s493 = smul.addr %s492, 8
        %s494 = scalar_lea.vmem [#allocation7], %s493
        %p495 = pneg %p138
        %p496 = pneg %p135
        %p497 = pneg %p159
        %p498 = pneg %p156
        %p499 = pneg %p180
        %p500 = pneg %p177
        %p501 = pneg %p201
        %p502 = pneg %p198
        %p503 = pneg %p222
        %p504 = pneg %p219
        %p505 = pneg %p243
        %p506 = pneg %p240
        %p507 = pneg %p264
        %p508 = pneg %p261
        %p509 = pneg %p292
        %p510 = pneg %p289
        %s511 = sand.u32 %s279, 1
        %s512 = scalar_lea.sflag [#allocation4], %s511
        %s513 = sand.u32 %s279, 1
        %s514 = smul.addr %s513, 16
        %s515 = scalar_lea.vmem [#allocation13], %s514
        %s516 = smul.u32 2, %s36
        %s517 = smul.u32 %s36, 2
        %s518 = ssub.s32 %s517, 1
        %p519 = scmp.gt.s32.totalorder %s518, 0
        %s520 = scalar_select %p519, %s518, 0
        %s521 = sadd.s32 %s36, 1
        %s522 = smul.u32 %s521, 2
        %p523 = scmp.lt.s32.totalorder %s522, 1
        %s524 = scalar_select %p523, %s522, 1
        %s525 = smul.u32 2, %s36
        %v527 = vld [vmem:[%s450] sm:$0xff]
        %v528 = vpack.c.bf16 %v527, %v527
        %v529 = vld [vmem:[%s441] sm:$0xff]
        %v530 = vld [vmem:[%s441 + $0x8] sm:$0xff]
        %v531 = vpack.c.bf16 %v530, %v529
        %v532 = vld [vmem:[%s459] sm:$0xff]
        %v533 = vpack.c.bf16 %v532, %v532
        %v535 = vrot.slane %v531, 4
        %v537 = vrot.slane %v533, 4
        %vm538 = vcmask 1043456
        %v541 = vsel %vm538, %v528, %v535
        %v543 = vsel %vm538, %v535, %v537
        %v544 = vld [vmem:[#allocation8] sm:$0xf]
        %v545 = vld [vmem:[#allocation8 + $0x4] sm:$0xf]
        %v546 = vld [vmem:[#allocation8 + $0x8] sm:$0xf]
        %v547 = vld [vmem:[#allocation8 + $0xc] sm:$0xf]
        %v548 = vld [vmem:[%s4] sm:$0x1]
        %v550 = vlaneseq
        %v551 = vshrl.u32 %v550, 7
        %v552 = vsub.s32 0, %v551
        %v553 = vrot.slane %v548, %v552
        %v559 = vunpack.c.l.b16 %v544
        %v560 = vunpack.c.l.b16 %v545
        %v561 = vunpack.c.l.b16 %v546
        %v562 = vunpack.c.l.b16 %v547
        %v563 = vpack.c.b16 %v560, %v559
        %v564 = vpack.c.b16 %v562, %v561
        %vm567 = vcmask 261120
        %v568 = vsel %vm567, %v541, 0
        %v570 = vsel %vm567, %v543, 0
        %572 = vmatprep.subr.bf16.mxu0 0
        %573 = vmatpush1.bf16.msra.mxu0 %v563
        %574 = vmatprep.subr.bf16.mxu0 0
        %575 = vmatpush1.bf16.msra.mxu0 %v564
        %576 = vmatprep.subr.bf16.mxu0 0
        %577 = vmatpush1.bf16.msra.mxu0 0
        %578 = vmatprep.subr.bf16.mxu0 0
        %579 = vmatpush1.bf16.msra.mxu0 0
        %580 = vmatprep.subr.bf16.mxu0 0
        %581 = vmatpush1.bf16.msra.mxu0 0
        %582 = vmatprep.subr.bf16.mxu0 0
        %583 = vmatpush1.bf16.msra.mxu0 0
        %584 = vmatprep.subr.bf16.mxu0 0
        %585 = vmatpush1.bf16.msra.mxu0 0
        %586 = vmatprep.subr.bf16.mxu0 0
        %587 = vmatpush1.bf16.msra.mxu0 0
        %588 = vmatprep.subr.bf16.mxu0 0
        %589 = vmatpush1.bf16.msra.mxu0 0
        %590 = vmatprep.subr.bf16.mxu0 0
        %591 = vmatpush1.bf16.msra.mxu0 0
        %592 = vmatprep.subr.bf16.mxu0 0
        %593 = vmatpush1.bf16.msra.mxu0 0
        %594 = vmatprep.subr.bf16.mxu0 0
        %595 = vmatpush1.bf16.msra.mxu0 0
        %596 = vmatprep.subr.bf16.mxu0 0
        %597 = vmatpush1.bf16.msra.mxu0 0
        %598 = vmatprep.subr.bf16.mxu0 0
        %599 = vmatpush1.bf16.msra.mxu0 0
        %600 = vmatprep.subr.bf16.mxu0 0
        %601 = vmatpush1.bf16.msra.mxu0 0
        %602 = vmatprep.subr.bf16.mxu0 0
        %603 = vmatpush1.bf16.msra.mxu0 0
        %604 = vmatprep.mubr.bf16.mxu0 0
        %605 = vmatmul.mubr.bf16.gmra.mrb[0].mxu0 %v568
        %v606 = vpop.f32.mrb[0].mxu0
        %v607 = vadd.f32 %v553, %v606
        %v608 = vpop.f32.mrb[0].mxu0
        %v609 = vpop.f32.mrb[0].mxu0
        %v610 = vadd.f32 %v553, %v609
        %v611 = vpop.f32.mrb[0].mxu0
        %612 = vmatprep.mubr.bf16.mxu0 0
        %613 = vmatmul.mubr.bf16.gmra.mrb[0].mxu0 %v570
        %v614 = vpop.f32.mrb[0].mxu0
        %v615 = vadd.f32 %v553, %v614
        %v616 = vpop.f32.mrb[0].mxu0
        %v617 = vpop.f32.mrb[0].mxu0
        %v618 = vadd.f32 %v553, %v617
        %v619 = vpop.f32.mrb[0].mxu0
        %620 = vdwg.mxu0
        %v621 = vmax.f32 %v607, 0.0
        %v622 = vmax.f32 %v610, 0.0
        %v623 = vmax.f32 %v615, 0.0
        %v624 = vmax.f32 %v618, 0.0
        %v625 = vlaneseq
        %v626 = vshrl.u32 %v625, 7
        %v627 = vadd.s32 %v626, 8
        %v628 = vadd.s32 %v626, 16
        %v629 = vadd.s32 %v626, 24
        %s630 = smul.u32 %s36, 16
        %v631 = vstv %s630
        %v632 = vadd.s32 %v631, %v626
        %v633 = vadd.s32 %v631, %v627
        %v634 = vadd.s32 %v631, %v628
        %v635 = vadd.s32 %v631, %v629
        %v636 = vsub.s32 %v632, 8
        %v637 = vsub.s32 %v633, 8
        %v638 = vsub.s32 %v634, 8
        %v639 = vsub.s32 %v635, 8
        %vm640 = vcmp.ge.s32.totalorder %v636, 0
        %vm641 = vcmp.ge.s32.totalorder %v637, 0
        %vm642 = vcmp.ge.s32.totalorder %v638, 0
        %vm643 = vcmp.ge.s32.totalorder %v639, 0
        %vm644 = vcmp.lt.s32.totalorder %v636, 16
        %vm645 = vcmp.lt.s32.totalorder %v637, 16
        %vm646 = vcmp.lt.s32.totalorder %v638, 16
        %vm647 = vcmp.lt.s32.totalorder %v639, 16
        %vm648 = vmand %vm640, %vm644
        %vm649 = vmand %vm641, %vm645
        %vm650 = vmand %vm642, %vm646
        %vm651 = vmand %vm643, %vm647
        %v652 = vsel %vm648, 1, 0
        %v653 = vsel %vm649, 1, 0
        %v654 = vsel %vm650, 1, 0
        %v655 = vsel %vm651, 1, 0
        %vm656 = vcmp.eq.s32.totalorder %v652, 1
        %vm657 = vcmp.eq.s32.totalorder %v653, 1
        %vm658 = vcmp.eq.s32.totalorder %v654, 1
        %vm659 = vcmp.eq.s32.totalorder %v655, 1
        %v660 = vsel %vm656, %v621, 0.0
        %v661 = vsel %vm657, %v622, 0.0
        %v662 = vsel %vm658, %v623, 0.0
        %v663 = vsel %vm659, %v624, 0.0
        %v664 = vpack.c.bf16 %v661, %v660
        %v665 = vpack.c.bf16 %v663, %v662
        %vm666 = vsmask.f32 7424
        %v668 = vshrl.u32 %v664, 16
        %v670 = vshll.u32 %v664, 16
        %v672 = vrot.slane %v670, 1
        %v673 = vor.u32 %v668, %v672
        %v675 = vshll.u32 %v665, 16
        %v677 = vrot.slane %v675, 1
        %v678 = vsel %vm666, %v673, %v677
        %v679 = vshrl.u32 %v665, 16
        %v681 = vor.u32 %v679, %v677
        %vm684 = vcmask 1046528
        %v685 = vrot.slane %v664, 1
        %v686 = vrot.slane %v665, 1
        %v687 = vsel %vm684, %v685, %v686
        %vm688 = vsmask.f32 6400
        %v689 = vrot.slane %v668, 1
        %v690 = vrot.slane %v670, 2
        %v691 = vor.u32 %v689, %v690
        %v692 = vrot.slane %v679, 1
        %v693 = vrot.slane %v675, 2
        %v694 = vor.u32 %v692, %v693
        %v695 = vsel %vm688, %v691, %v694
        %vm696 = vcmask 1045504
        %v697 = vrot.slane %v664, 2
        %v698 = vrot.slane %v665, 2
        %v699 = vsel %vm696, %v697, %v698
        %v700 = vld [vmem:[#allocation10] sm:$0xf]
        %v701 = vld [vmem:[#allocation10 + $0x4] sm:$0xf]
        %v702 = vld [vmem:[#allocation10 + $0x8] sm:$0xf]
        %v703 = vld [vmem:[#allocation10 + $0xc] sm:$0xf]
        %v704 = vld [vmem:[#allocation10 + $0x10] sm:$0xf]
        %v705 = vld [vmem:[#allocation10 + $0x14] sm:$0xf]
        %v706 = vld [vmem:[#allocation10 + $0x18] sm:$0xf]
        %v707 = vld [vmem:[#allocation10 + $0x1c] sm:$0xf]
        %v708 = vld [vmem:[#allocation10 + $0x20] sm:$0xf]
        %v709 = vld [vmem:[#allocation10 + $0x24] sm:$0xf]
        %v710 = vld [vmem:[#allocation10 + $0x28] sm:$0xf]
        %v711 = vld [vmem:[#allocation10 + $0x2c] sm:$0xf]
        %v712 = vld [vmem:[#allocation10 + $0x30] sm:$0xf]
        %v713 = vld [vmem:[#allocation10 + $0x34] sm:$0xf]
        %v714 = vld [vmem:[#allocation10 + $0x38] sm:$0xf]
        %v715 = vld [vmem:[#allocation10 + $0x3c] sm:$0xf]
        %v716 = vld [vmem:[#allocation10 + $0x40] sm:$0xf]
        %v717 = vld [vmem:[#allocation10 + $0x44] sm:$0xf]
        %v718 = vld [vmem:[#allocation10 + $0x48] sm:$0xf]
        %v719 = vld [vmem:[#allocation10 + $0x4c] sm:$0xf]
        %v720 = vld [vmem:[#allocation10 + $0x50] sm:$0xf]
        %v721 = vld [vmem:[#allocation10 + $0x54] sm:$0xf]
        %v722 = vld [vmem:[#allocation10 + $0x58] sm:$0xf]
        %v723 = vld [vmem:[#allocation10 + $0x5c] sm:$0xf]
        %v724 = vld [vmem:[#allocation10 + $0x60] sm:$0xf]
        %v725 = vld [vmem:[#allocation10 + $0x64] sm:$0xf]
        %v726 = vld [vmem:[#allocation10 + $0x68] sm:$0xf]
        %v727 = vld [vmem:[#allocation10 + $0x6c] sm:$0xf]
        %v728 = vld [vmem:[#allocation10 + $0x70] sm:$0xf]
        %v729 = vld [vmem:[#allocation10 + $0x74] sm:$0xf]
        %v730 = vld [vmem:[#allocation10 + $0x78] sm:$0xf]
        %v731 = vld [vmem:[#allocation10 + $0x7c] sm:$0xf]
        %v732 = vld [vmem:[#allocation10 + $0x80] sm:$0xf]
        %v733 = vld [vmem:[#allocation10 + $0x84] sm:$0xf]
        %v734 = vld [vmem:[#allocation10 + $0x88] sm:$0xf]
        %v735 = vld [vmem:[#allocation10 + $0x8c] sm:$0xf]
        %v736 = vld [vmem:[#allocation10 + $0x90] sm:$0xf]
        %v737 = vld [vmem:[#allocation10 + $0x94] sm:$0xf]
        %v738 = vld [vmem:[#allocation10 + $0x98] sm:$0xf]
        %v739 = vld [vmem:[#allocation10 + $0x9c] sm:$0xf]
        %v740 = vld [vmem:[#allocation10 + $0xa0] sm:$0xf]
        %v741 = vld [vmem:[#allocation10 + $0xa4] sm:$0xf]
        %v742 = vld [vmem:[#allocation10 + $0xa8] sm:$0xf]
        %v743 = vld [vmem:[#allocation10 + $0xac] sm:$0xf]
        %v744 = vld [vmem:[#allocation10 + $0xb0] sm:$0xf]
        %v745 = vld [vmem:[#allocation10 + $0xb4] sm:$0xf]
        %v746 = vld [vmem:[#allocation10 + $0xb8] sm:$0xf]
        %v747 = vld [vmem:[#allocation10 + $0xbc] sm:$0xf]
        %v748 = vld [vmem:[#allocation10 + $0xc0] sm:$0xf]
        %v749 = vld [vmem:[#allocation10 + $0xc4] sm:$0xf]
        %v750 = vld [vmem:[#allocation10 + $0xc8] sm:$0xf]
        %v751 = vld [vmem:[#allocation10 + $0xcc] sm:$0xf]
        %v752 = vld [vmem:[#allocation10 + $0xd0] sm:$0xf]
        %v753 = vld [vmem:[#allocation10 + $0xd4] sm:$0xf]
        %v754 = vld [vmem:[#allocation10 + $0xd8] sm:$0xf]
        %v755 = vld [vmem:[#allocation10 + $0xdc] sm:$0xf]
        %v756 = vld [vmem:[#allocation10 + $0xe0] sm:$0xf]
        %v757 = vld [vmem:[#allocation10 + $0xe4] sm:$0xf]
        %v758 = vld [vmem:[#allocation10 + $0xe8] sm:$0xf]
        %v759 = vld [vmem:[#allocation10 + $0xec] sm:$0xf]
        %v760 = vld [vmem:[#allocation10 + $0xf0] sm:$0xf]
        %v761 = vld [vmem:[#allocation10 + $0xf4] sm:$0xf]
        %v762 = vld [vmem:[#allocation10 + $0xf8] sm:$0xf]
        %v763 = vld [vmem:[#allocation10 + $0xfc] sm:$0xf]
        %v764 = vld [vmem:[#allocation10 + $0x100] sm:$0xf]
        %v765 = vld [vmem:[#allocation10 + $0x104] sm:$0xf]
        %v766 = vld [vmem:[#allocation10 + $0x108] sm:$0xf]
        %v767 = vld [vmem:[#allocation10 + $0x10c] sm:$0xf]
        %v768 = vld [vmem:[#allocation10 + $0x110] sm:$0xf]
        %v769 = vld [vmem:[#allocation10 + $0x114] sm:$0xf]
        %v770 = vld [vmem:[#allocation10 + $0x118] sm:$0xf]
        %v771 = vld [vmem:[#allocation10 + $0x11c] sm:$0xf]
        %v772 = vld [vmem:[#allocation10 + $0x120] sm:$0xf]
        %v773 = vld [vmem:[#allocation10 + $0x124] sm:$0xf]
        %v774 = vld [vmem:[#allocation10 + $0x128] sm:$0xf]
        %v775 = vld [vmem:[#allocation10 + $0x12c] sm:$0xf]
        %v776 = vld [vmem:[#allocation10 + $0x130] sm:$0xf]
        %v777 = vld [vmem:[#allocation10 + $0x134] sm:$0xf]
        %v778 = vld [vmem:[#allocation10 + $0x138] sm:$0xf]
        %v779 = vld [vmem:[#allocation10 + $0x13c] sm:$0xf]
        %v780 = vld [vmem:[%s6] sm:$0x1]
        %v782 = vlaneseq
        %v783 = vshrl.u32 %v782, 7
        %v784 = vsub.s32 0, %v783
        %v785 = vrot.slane %v780, %v784
        %vm787 = vcmask 1044480
        %v788 = vrot.slane %v664, 3
        %v789 = vrot.slane %v665, 3
        %v790 = vsel %vm787, %v788, %v789
        %v791 = vrot.slane %v678, 3
        %v792 = vrot.slane %v681, 3
        %v793 = vsel %vm787, %v791, %v792
        %v794 = vrot.slane %v687, 3
        %v795 = vrot.slane %v686, 3
        %v796 = vsel %vm787, %v794, %v795
        %v797 = vrot.slane %v695, 3
        %v798 = vrot.slane %v694, 3
        %v799 = vsel %vm787, %v797, %v798
        %v800 = vrot.slane %v699, 3
        %v801 = vrot.slane %v698, 3
        %v802 = vsel %vm787, %v800, %v801
        %v888 = vunpack.c.l.b16 %v700
        %v889 = vunpack.c.l.b16 %v701
        %v890 = vunpack.c.l.b16 %v702
        %v891 = vunpack.c.l.b16 %v703
        %v892 = vunpack.c.l.b16 %v704
        %v893 = vunpack.c.l.b16 %v705
        %v894 = vunpack.c.l.b16 %v706
        %v895 = vunpack.c.l.b16 %v707
        %v896 = vunpack.c.l.b16 %v708
        %v897 = vunpack.c.l.b16 %v709
        %v898 = vunpack.c.l.b16 %v710
        %v899 = vunpack.c.l.b16 %v711
        %v900 = vunpack.c.l.b16 %v712
        %v901 = vunpack.c.l.b16 %v713
        %v902 = vunpack.c.l.b16 %v714
        %v903 = vunpack.c.l.b16 %v715
        %v904 = vunpack.c.l.b16 %v716
        %v905 = vunpack.c.l.b16 %v717
        %v906 = vunpack.c.l.b16 %v718
        %v907 = vunpack.c.l.b16 %v719
        %v908 = vunpack.c.l.b16 %v720
        %v909 = vunpack.c.l.b16 %v721
        %v910 = vunpack.c.l.b16 %v722
        %v911 = vunpack.c.l.b16 %v723
        %v912 = vunpack.c.l.b16 %v724
        %v913 = vunpack.c.l.b16 %v725
        %v914 = vunpack.c.l.b16 %v726
        %v915 = vunpack.c.l.b16 %v727
        %v916 = vunpack.c.l.b16 %v728
        %v917 = vunpack.c.l.b16 %v729
        %v918 = vunpack.c.l.b16 %v730
        %v919 = vunpack.c.l.b16 %v731
        %v920 = vunpack.c.l.b16 %v732
        %v921 = vunpack.c.l.b16 %v733
        %v922 = vunpack.c.l.b16 %v734
        %v923 = vunpack.c.l.b16 %v735
        %v924 = vunpack.c.l.b16 %v736
        %v925 = vunpack.c.l.b16 %v737
        %v926 = vunpack.c.l.b16 %v738
        %v927 = vunpack.c.l.b16 %v739
        %v928 = vunpack.c.l.b16 %v740
        %v929 = vunpack.c.l.b16 %v741
        %v930 = vunpack.c.l.b16 %v742
        %v931 = vunpack.c.l.b16 %v743
        %v932 = vunpack.c.l.b16 %v744
        %v933 = vunpack.c.l.b16 %v745
        %v934 = vunpack.c.l.b16 %v746
        %v935 = vunpack.c.l.b16 %v747
        %v936 = vunpack.c.l.b16 %v748
        %v937 = vunpack.c.l.b16 %v749
        %v938 = vunpack.c.l.b16 %v750
        %v939 = vunpack.c.l.b16 %v751
        %v940 = vunpack.c.l.b16 %v752
        %v941 = vunpack.c.l.b16 %v753
        %v942 = vunpack.c.l.b16 %v754
        %v943 = vunpack.c.l.b16 %v755
        %v944 = vunpack.c.l.b16 %v756
        %v945 = vunpack.c.l.b16 %v757
        %v946 = vunpack.c.l.b16 %v758
        %v947 = vunpack.c.l.b16 %v759
        %v948 = vunpack.c.l.b16 %v760
        %v949 = vunpack.c.l.b16 %v761
        %v950 = vunpack.c.l.b16 %v762
        %v951 = vunpack.c.l.b16 %v763
        %v952 = vunpack.c.l.b16 %v764
        %v953 = vunpack.c.l.b16 %v765
        %v954 = vunpack.c.l.b16 %v766
        %v955 = vunpack.c.l.b16 %v767
        %v956 = vunpack.c.l.b16 %v768
        %v957 = vunpack.c.l.b16 %v769
        %v958 = vunpack.c.l.b16 %v770
        %v959 = vunpack.c.l.b16 %v771
        %v960 = vunpack.c.l.b16 %v772
        %v961 = vunpack.c.l.b16 %v773
        %v962 = vunpack.c.l.b16 %v774
        %v963 = vunpack.c.l.b16 %v775
        %v964 = vunpack.c.l.b16 %v776
        %v965 = vunpack.c.l.b16 %v777
        %v966 = vunpack.c.l.b16 %v778
        %v967 = vunpack.c.l.b16 %v779
        %v968 = vpack.c.b16 %v889, %v888
        %v969 = vpack.c.b16 %v891, %v890
        %v970 = vpack.c.b16 %v893, %v892
        %v971 = vpack.c.b16 %v895, %v894
        %v972 = vpack.c.b16 %v897, %v896
        %v973 = vpack.c.b16 %v899, %v898
        %v974 = vpack.c.b16 %v901, %v900
        %v975 = vpack.c.b16 %v903, %v902
        %v976 = vpack.c.b16 %v905, %v904
        %v977 = vpack.c.b16 %v907, %v906
        %v978 = vpack.c.b16 %v909, %v908
        %v979 = vpack.c.b16 %v911, %v910
        %v980 = vpack.c.b16 %v913, %v912
        %v981 = vpack.c.b16 %v915, %v914
        %v982 = vpack.c.b16 %v917, %v916
        %v983 = vpack.c.b16 %v919, %v918
        %v984 = vpack.c.b16 %v921, %v920
        %v985 = vpack.c.b16 %v923, %v922
        %v986 = vpack.c.b16 %v925, %v924
        %v987 = vpack.c.b16 %v927, %v926
        %v988 = vpack.c.b16 %v929, %v928
        %v989 = vpack.c.b16 %v931, %v930
        %v990 = vpack.c.b16 %v933, %v932
        %v991 = vpack.c.b16 %v935, %v934
        %v992 = vpack.c.b16 %v937, %v936
        %v993 = vpack.c.b16 %v939, %v938
        %v994 = vpack.c.b16 %v941, %v940
        %v995 = vpack.c.b16 %v943, %v942
        %v996 = vpack.c.b16 %v945, %v944
        %v997 = vpack.c.b16 %v947, %v946
        %v998 = vpack.c.b16 %v949, %v948
        %v999 = vpack.c.b16 %v951, %v950
        %v1000 = vpack.c.b16 %v953, %v952
        %v1001 = vpack.c.b16 %v955, %v954
        %v1002 = vpack.c.b16 %v957, %v956
        %v1003 = vpack.c.b16 %v959, %v958
        %v1004 = vpack.c.b16 %v961, %v960
        %v1005 = vpack.c.b16 %v963, %v962
        %v1006 = vpack.c.b16 %v965, %v964
        %v1007 = vpack.c.b16 %v967, %v966
        %1048 = vmatprep.subr.bf16.mxu0 0
        %1049 = vmatpush1.bf16.msra.mxu0 %v968
        %1050 = vmatprep.subr.bf16.mxu0 0
        %1051 = vmatpush1.bf16.msra.mxu0 %v969
        %1052 = vmatprep.subr.bf16.mxu0 0
        %1053 = vmatpush1.bf16.msra.mxu0 %v970
        %1054 = vmatprep.subr.bf16.mxu0 0
        %1055 = vmatpush1.bf16.msra.mxu0 %v971
        %1056 = vmatprep.subr.bf16.mxu0 0
        %1057 = vmatpush1.bf16.msra.mxu0 %v972
        %1058 = vmatprep.subr.bf16.mxu0 0
        %1059 = vmatpush1.bf16.msra.mxu0 %v973
        %1060 = vmatprep.subr.bf16.mxu0 0
        %1061 = vmatpush1.bf16.msra.mxu0 %v974
        %1062 = vmatprep.subr.bf16.mxu0 0
        %1063 = vmatpush1.bf16.msra.mxu0 %v975
        %1064 = vmatprep.subr.bf16.mxu0 0
        %1065 = vmatpush1.bf16.msra.mxu0 %v976
        %1066 = vmatprep.subr.bf16.mxu0 0
        %1067 = vmatpush1.bf16.msra.mxu0 %v977
        %1068 = vmatprep.subr.bf16.mxu0 0
        %1069 = vmatpush1.bf16.msra.mxu0 %v978
        %1070 = vmatprep.subr.bf16.mxu0 0
        %1071 = vmatpush1.bf16.msra.mxu0 %v979
        %1072 = vmatprep.subr.bf16.mxu0 0
        %1073 = vmatpush1.bf16.msra.mxu0 %v980
        %1074 = vmatprep.subr.bf16.mxu0 0
        %1075 = vmatpush1.bf16.msra.mxu0 %v981
        %1076 = vmatprep.subr.bf16.mxu0 0
        %1077 = vmatpush1.bf16.msra.mxu0 %v982
        %1078 = vmatprep.subr.bf16.mxu0 0
        %1079 = vmatpush1.bf16.msra.mxu0 %v983
        %1080 = vmatprep.mubr.bf16.mxu0 %v793
        %1081 = vmatmul.mubr.bf16.gmra.mrb[0].mxu0 %v790
        %v1082 = vpop.f32.mrb[0].mxu0
        %v1083 = vadd.f32 %v785, %v1082
        %v1084 = vpop.f32.mrb[0].mxu0
        %v1085 = vpop.f32.mrb[0].mxu0
        %v1086 = vadd.f32 %v785, %v1085
        %v1087 = vpop.f32.mrb[0].mxu0
        %1088 = vdwg.mxu0
        %1089 = vmatprep.subr.bf16.mxu0 0
        %1090 = vmatpush1.bf16.msra.mxu0 %v984
        %1091 = vmatprep.subr.bf16.mxu0 0
        %1092 = vmatpush1.bf16.msra.mxu0 %v985
        %1093 = vmatprep.subr.bf16.mxu0 0
        %1094 = vmatpush1.bf16.msra.mxu0 %v986
        %1095 = vmatprep.subr.bf16.mxu0 0
        %1096 = vmatpush1.bf16.msra.mxu0 %v987
        %1097 = vmatprep.subr.bf16.mxu0 0
        %1098 = vmatpush1.bf16.msra.mxu0 %v988
        %1099 = vmatprep.subr.bf16.mxu0 0
        %1100 = vmatpush1.bf16.msra.mxu0 %v989
        %1101 = vmatprep.subr.bf16.mxu0 0
        %1102 = vmatpush1.bf16.msra.mxu0 %v990
        %1103 = vmatprep.subr.bf16.mxu0 0
        %1104 = vmatpush1.bf16.msra.mxu0 %v991
        %1105 = vmatprep.subr.bf16.mxu0 0
        %1106 = vmatpush1.bf16.msra.mxu0 %v992
        %1107 = vmatprep.subr.bf16.mxu0 0
        %1108 = vmatpush1.bf16.msra.mxu0 %v993
        %1109 = vmatprep.subr.bf16.mxu0 0
        %1110 = vmatpush1.bf16.msra.mxu0 %v994
        %1111 = vmatprep.subr.bf16.mxu0 0
        %1112 = vmatpush1.bf16.msra.mxu0 %v995
        %1113 = vmatprep.subr.bf16.mxu0 0
        %1114 = vmatpush1.bf16.msra.mxu0 %v996
        %1115 = vmatprep.subr.bf16.mxu0 0
        %1116 = vmatpush1.bf16.msra.mxu0 %v997
        %1117 = vmatprep.subr.bf16.mxu0 0
        %1118 = vmatpush1.bf16.msra.mxu0 %v998
        %1119 = vmatprep.subr.bf16.mxu0 0
        %1120 = vmatpush1.bf16.msra.mxu0 %v999
        %1121 = vmatprep.mubr.bf16.mxu0 %v799
        %1122 = vmatmul.mubr.bf16.gmra.mrb[0].mxu0 %v796
        %v1123 = vpop.f32.mrb[0].mxu0
        %v1124 = vadd.f32 %v1083, %v1123
        %v1125 = vpop.f32.mrb[0].mxu0
        %v1126 = vpop.f32.mrb[0].mxu0
        %v1127 = vadd.f32 %v1086, %v1126
        %v1128 = vpop.f32.mrb[0].mxu0
        %1129 = vdwg.mxu0
        %1130 = vmatprep.subr.bf16.mxu0 0
        %1131 = vmatpush1.bf16.msra.mxu0 %v1000
        %1132 = vmatprep.subr.bf16.mxu0 0
        %1133 = vmatpush1.bf16.msra.mxu0 %v1001
        %1134 = vmatprep.subr.bf16.mxu0 0
        %1135 = vmatpush1.bf16.msra.mxu0 %v1002
        %1136 = vmatprep.subr.bf16.mxu0 0
        %1137 = vmatpush1.bf16.msra.mxu0 %v1003
        %1138 = vmatprep.subr.bf16.mxu0 0
        %1139 = vmatpush1.bf16.msra.mxu0 %v1004
        %1140 = vmatprep.subr.bf16.mxu0 0
        %1141 = vmatpush1.bf16.msra.mxu0 %v1005
        %1142 = vmatprep.subr.bf16.mxu0 0
        %1143 = vmatpush1.bf16.msra.mxu0 %v1006
        %1144 = vmatprep.subr.bf16.mxu0 0
        %1145 = vmatpush1.bf16.msra.mxu0 %v1007
        %1146 = vmatprep.subr.bf16.mxu0 0
        %1147 = vmatpush1.bf16.msra.mxu0 0
        %1148 = vmatprep.subr.bf16.mxu0 0
        %1149 = vmatpush1.bf16.msra.mxu0 0
        %1150 = vmatprep.subr.bf16.mxu0 0
        %1151 = vmatpush1.bf16.msra.mxu0 0
        %1152 = vmatprep.subr.bf16.mxu0 0
        %1153 = vmatpush1.bf16.msra.mxu0 0
        %1154 = vmatprep.subr.bf16.mxu0 0
        %1155 = vmatpush1.bf16.msra.mxu0 0
        %1156 = vmatprep.subr.bf16.mxu0 0
        %1157 = vmatpush1.bf16.msra.mxu0 0
        %1158 = vmatprep.subr.bf16.mxu0 0
        %1159 = vmatpush1.bf16.msra.mxu0 0
        %1160 = vmatprep.subr.bf16.mxu0 0
        %1161 = vmatpush1.bf16.msra.mxu0 0
        %1162 = vmatprep.mubr.bf16.mxu0 0
        %1163 = vmatmul.mubr.bf16.gmra.mrb[0].mxu0 %v802
        %v1164 = vpop.f32.mrb[0].mxu0
        %v1165 = vadd.f32 %v1124, %v1164
        %v1166 = vpop.f32.mrb[0].mxu0
        %v1167 = vpop.f32.mrb[0].mxu0
        %v1168 = vadd.f32 %v1127, %v1167
        %v1169 = vpop.f32.mrb[0].mxu0
        %1170 = vdwg.mxu0
        %v1171 = vmax.f32 %v1165, 0.0
        %v1172 = vmax.f32 %v1168, 0.0
        %v1173 = vpack.c.bf16 %v1172, %v1171
        %v1174 = vld [vmem:[#allocation11] sm:$0xf]
        %v1175 = vld [vmem:[#allocation11 + $0x4] sm:$0xf]
        %v1176 = vld [vmem:[#allocation11 + $0x8] sm:$0xf]
        %v1177 = vld [vmem:[#allocation11 + $0xc] sm:$0xf]
        %v1178 = vld [vmem:[#allocation11 + $0x10] sm:$0xf]
        %v1179 = vld [vmem:[#allocation11 + $0x14] sm:$0xf]
        %v1180 = vld [vmem:[#allocation11 + $0x18] sm:$0xf]
        %v1181 = vld [vmem:[#allocation11 + $0x1c] sm:$0xf]
        %v1182 = vld [vmem:[#allocation11 + $0x20] sm:$0xf]
        %v1183 = vld [vmem:[#allocation11 + $0x24] sm:$0xf]
        %v1184 = vld [vmem:[#allocation11 + $0x28] sm:$0xf]
        %v1185 = vld [vmem:[#allocation11 + $0x2c] sm:$0xf]
        %v1186 = vld [vmem:[#allocation11 + $0x30] sm:$0xf]
        %v1187 = vld [vmem:[#allocation11 + $0x34] sm:$0xf]
        %v1188 = vld [vmem:[#allocation11 + $0x38] sm:$0xf]
        %v1189 = vld [vmem:[#allocation11 + $0x3c] sm:$0xf]
        %v1190 = vld [vmem:[%s8] sm:$0x1]
        %v1192 = vlaneseq
        %v1193 = vshrl.u32 %v1192, 7
        %v1194 = vsub.s32 0, %v1193
        %v1195 = vrot.slane %v1190, %v1194
        %v1213 = vunpack.c.l.b16 %v1174
        %v1214 = vunpack.c.l.b16 %v1175
        %v1215 = vunpack.c.l.b16 %v1176
        %v1216 = vunpack.c.l.b16 %v1177
        %v1217 = vunpack.c.l.b16 %v1178
        %v1218 = vunpack.c.l.b16 %v1179
        %v1219 = vunpack.c.l.b16 %v1180
        %v1220 = vunpack.c.l.b16 %v1181
        %v1221 = vunpack.c.l.b16 %v1182
        %v1222 = vunpack.c.l.b16 %v1183
        %v1223 = vunpack.c.l.b16 %v1184
        %v1224 = vunpack.c.l.b16 %v1185
        %v1225 = vunpack.c.l.b16 %v1186
        %v1226 = vunpack.c.l.b16 %v1187
        %v1227 = vunpack.c.l.b16 %v1188
        %v1228 = vunpack.c.l.b16 %v1189
        %v1229 = vpack.c.b16 %v1214, %v1213
        %v1230 = vpack.c.b16 %v1216, %v1215
        %v1231 = vpack.c.b16 %v1218, %v1217
        %v1232 = vpack.c.b16 %v1220, %v1219
        %v1233 = vpack.c.b16 %v1222, %v1221
        %v1234 = vpack.c.b16 %v1224, %v1223
        %v1235 = vpack.c.b16 %v1226, %v1225
        %v1236 = vpack.c.b16 %v1228, %v1227
        %1245 = vmatprep.subr.bf16.mxu0 0
        %1246 = vmatpush1.bf16.msra.mxu0 %v1229
        %1247 = vmatprep.subr.bf16.mxu0 0
        %1248 = vmatpush1.bf16.msra.mxu0 %v1230
        %1249 = vmatprep.subr.bf16.mxu0 0
        %1250 = vmatpush1.bf16.msra.mxu0 %v1231
        %1251 = vmatprep.subr.bf16.mxu0 0
        %1252 = vmatpush1.bf16.msra.mxu0 %v1232
        %1253 = vmatprep.subr.bf16.mxu0 0
        %1254 = vmatpush1.bf16.msra.mxu0 %v1233
        %1255 = vmatprep.subr.bf16.mxu0 0
        %1256 = vmatpush1.bf16.msra.mxu0 %v1234
        %1257 = vmatprep.subr.bf16.mxu0 0
        %1258 = vmatpush1.bf16.msra.mxu0 %v1235
        %1259 = vmatprep.subr.bf16.mxu0 0
        %1260 = vmatpush1.bf16.msra.mxu0 %v1236
        %1261 = vmatprep.subr.bf16.mxu0 0
        %1262 = vmatpush1.bf16.msra.mxu0 0
        %1263 = vmatprep.subr.bf16.mxu0 0
        %1264 = vmatpush1.bf16.msra.mxu0 0
        %1265 = vmatprep.subr.bf16.mxu0 0
        %1266 = vmatpush1.bf16.msra.mxu0 0
        %1267 = vmatprep.subr.bf16.mxu0 0
        %1268 = vmatpush1.bf16.msra.mxu0 0
        %1269 = vmatprep.subr.bf16.mxu0 0
        %1270 = vmatpush1.bf16.msra.mxu0 0
        %1271 = vmatprep.subr.bf16.mxu0 0
        %1272 = vmatpush1.bf16.msra.mxu0 0
        %1273 = vmatprep.subr.bf16.mxu0 0
        %1274 = vmatpush1.bf16.msra.mxu0 0
        %1275 = vmatprep.subr.bf16.mxu0 0
        %1276 = vmatpush1.bf16.msra.mxu0 0
        %1277 = vmatprep.mubr.bf16.mxu0 0
        %1278 = vmatmul.mubr.bf16.gmra.mrb[0].mxu0 %v1173
        %v1279 = vpop.f32.mrb[0].mxu0
        %v1280 = vadd.f32 %v1195, %v1279
        %v1281 = vpop.f32.mrb[0].mxu0
        %v1282 = vpop.f32.mrb[0].mxu0
        %v1283 = vadd.f32 %v1195, %v1282
        %v1284 = vpop.f32.mrb[0].mxu0
        %1285 = vdwg.mxu0
        %1286 = vst [vmem:[%s515] sm:$0xff] %v1280
        %1287 = vst [vmem:[%s515 + $0x8] sm:$0xff] %v1283
        %s1288 = sand.u32 %s279, 1
        %s1289 = scalar_lea.sflag [#allocation4], %s1288
        %s1290 = sand.u32 %s279, 1
        %s1291 = smul.addr %s1290, 16
        %s1292 = scalar_lea.vmem [#allocation13], %s1291
        // Predicated region
        $region81: #{tpu_custom_call.1} parent=55 // pred_check
          %p1293 = pneg %p289
        $region82: #{tpu_custom_call.1} parent=55 // pred_check_branch
          %1295 = sbr.rel (%p1293) target = $region84
        $region83: #{tpu_custom_call.1} parent=55 // pred_region
          %s1296 = smul.u32 2, %s36
          %s1298 = ssub.s32 256, 256
          %1299 = vsyncadd %s1289, %s1298
          %s1300 = smul.addr %s35, 2
          %s1301 = sadd.s32 %s1296, %s1300
          %s1302 = smul.addr %s1301, 128
          %s1303 = scalar_lea.hbm %s9, %s1302
          %s1304 = sshll.u32 %s1292, 4
          %s1305 = int_to_ptr.vmem [resolvable:$true] %s1304
          %1310 = dma.vmem_to_hbm [thread:$0]  %s1305, 256, %s1303, %s1289, 128, 128, 8
        $region84: #{tpu_custom_call.1} parent=55 // pred_fallthru
          _
      $region56: #{tpu_custom_call.1} parent=5 // pred_fallthru
        _
      %p1311 = scmp.le.s32.totalorder 2, %s26
      // Predicated region
      $region85: #{tpu_custom_call.1} parent=5 // pred_check
        %p1312 = pneg %p1311
      $region86: #{tpu_custom_call.1} parent=5 // pred_check_branch
        %1314 = sbr.rel (%p1312) target = $region88
      $region87: #{tpu_custom_call.1} parent=5 // pred_region
        %s1315 = ssub.s32 %s26, 2
        // Predicated region
        $region89: #{tpu_custom_call.1} parent=87 // pred_check
          %p1316 = pneg %p295
        $region90: #{tpu_custom_call.1} parent=87 // pred_check_branch
          %1318 = sbr.rel (%p1316) target = $region92
        $region91: #{tpu_custom_call.1} parent=87 // pred_region
          %s1319 = sand.u32 %s280, 1
          %s1320 = scalar_lea.sflag [#allocation4], %s1319
          %s1321 = sand.u32 %s280, 1
          %s1322 = smul.addr %s1321, 16
          %s1323 = scalar_lea.vmem [#allocation13], %s1322
          %1324 = dma.done %s1320, 256
        $region92: #{tpu_custom_call.1} parent=87 // pred_fallthru
          _
      $region88: #{tpu_custom_call.1} parent=5 // pred_fallthru
        _
    $region6: #{tpu_custom_call.1} parent=1 // loop_footer
      %s30 = sadd.s32 1, %s26
    $region7: #{tpu_custom_call.1} parent=1 // loop_footer_branch
      %25 = sbr.rel target = $region3
    $region8: #{tpu_custom_call.1} parent=1 // loop_exit
      _
    %1325 = vsyncpa [#allocation3], 1
    %s1326 = scalar_lea.sflag [#allocation3], 1
    %1327 = vsyncpa %s1326, 1
    %1328 = vsyncpa [#allocation6], 1
    %s1329 = scalar_lea.sflag [#allocation6], 1
    %1330 = vsyncpa %s1329, 1
    %1331 = vsyncpa [#allocation9], 1
    %1332 = vsyncpa [#allocation12], 1
    %1333 = vsyncpa [#allocation4], 1
    %s1334 = scalar_lea.sflag [#allocation4], 1
    %1335 = vsyncpa %s1334, 1

// kernel: tpu_custom_call.1
$region0: #{tpu_custom_call.1}
  #allocation0 [shape = 'u32[]', space=smem, size = 0x4, offset = 0x4, fixed_abs, tag = 'smem constant byte address 0x4 - core index']
  #allocation1 [shape = 'u32[144,128]{1,0:T(1,128)}', space=vmem, size = 0x12000, scoped, tag = 'internal scratch']
  %s0 = inlined_call_operand.hbm [shape: f32[2,16,32], index: 0, kind: input, shape index: {}]
  %s1 = inlined_call_operand.hbm [shape: f32[2,16,32], index: 1, kind: input, shape index: {}]
  %s2 = inlined_call_operand.hbm [shape: f32[2,16,32], index: 2, kind: input, shape index: {}]
  %s3 = inlined_call_operand.hbm [shape: bf16[32,128], index: 3, kind: input, shape index: {}]
  %s4 = inlined_call_operand.vmem [shape: f32[1,128], index: 4, kind: input, shape index: {}]
  %s5 = inlined_call_operand.hbm [shape: bf16[640,128], index: 5, kind: input, shape index: {}]
  %s6 = inlined_call_operand.vmem [shape: f32[1,128], index: 6, kind: input, shape index: {}]
  %s7 = inlined_call_operand.hbm [shape: bf16[128,128], index: 7, kind: input, shape index: {}]
  %s8 = inlined_call_operand.vmem [shape: f32[1,128], index: 8, kind: input, shape index: {}]
  %s9 = inlined_call_operand.hbm [shape: f32[2,16,128], index: 9, kind: output, shape index: {}]
  %s10 = sld [smem:[#allocation0]]
  $region93: #{tpu_custom_call.1} parent=0
    _
  %s12 = ssub.s32 1, %s10
  %s13 = scalar_select 0, %s12, %s10
  $region1: #{tpu_custom_call.1} parent=0
    #allocation2 [shape = 'u8[16384]{0}', space=vmem, size = 0x4000, scoped, tag = 'input window, operand 0']
    #allocation3 [shape = 's32[2]{0}', space=sflag, size = 0x8, scoped, tag = 'scoped memory for tpu_custom_call.1']
    #allocation4 [shape = 's32[2]{0}', space=sflag, size = 0x8, scoped, tag = 'scoped memory for tpu_custom_call.1']
    #allocation5 [shape = 'u8[8192]{0}', space=vmem, size = 0x2000, scoped, tag = 'input window, operand 1']
    #allocation6 [shape = 's32[2]{0}', space=sflag, size = 0x8, scoped, tag = 'scoped memory for tpu_custom_call.1']
    #allocation7 [shape = 'u8[8192]{0}', space=vmem, size = 0x2000, scoped, tag = 'input window, operand 2']
    #allocation8 [shape = 'u8[8192]{0}', space=vmem, size = 0x2000, scoped, tag = 'input window, operand 3, single buffered']
    #allocation9 [shape = 's32[1]{0}', space=sflag, size = 0x4, scoped, tag = 'scoped memory for tpu_custom_call.1']
    #allocation10 [shape = 'u8[163840]{0}', space=vmem, size = 0x28000, scoped, tag = 'input window, operand 5, single buffered']
    #allocation11 [shape = 'u8[32768]{0}', space=vmem, size = 0x8000, scoped, tag = 'input window, operand 7, single buffered']
    #allocation12 [shape = 's32[1]{0}', space=sflag, size = 0x4, scoped, tag = 'scoped memory for tpu_custom_call.1']
    #allocation13 [shape = 'u8[16384]{0}', space=vmem, size = 0x4000, scoped, tag = 'output window, operand 0']
    %14 = vsyncpa [#allocation3], 0
    %s15 = scalar_lea.sflag [#allocation3], 1
    %16 = vsyncpa %s15, 0
    %17 = vsyncpa [#allocation6], 0
    %s18 = scalar_lea.sflag [#allocation6], 1
    %19 = vsyncpa %s18, 0
    %20 = vsyncpa [#allocation9], 0
    %21 = vsyncpa [#allocation12], 0
    %22 = vsyncpa [#allocation4], 0
    %s23 = scalar_lea.sflag [#allocation4], 1
    %24 = vsyncpa %s23, 0
    loop: start=0, step=1, limit=4
    $region2: #{tpu_custom_call.1} parent=1 // loop_pre_header
      _
    $region3: #{tpu_custom_call.1} parent=1 // loop_header
      %s26 = sphi 0, %s30
      %p27 = scmp.ge.s32.totalorder %s26, 4
      %s33 = sphi 0, %s45
      %s34 = sphi 0, %s41
      %s35 = sphi 0, %s33
      %s36 = sphi 0, %s34
      %s37 = sphi 0, %s35
      %s38 = sphi 0, %s36
      %s50 = sphi 0, %s52
      %s53 = sphi 0, %s50
      %s54 = sphi 0, %s53
      %s70 = sphi 0, %s54
      %s86 = sphi 0, %s88
      %s89 = sphi 0, %s86
      %s90 = sphi 0, %s89
      %s106 = sphi 0, %s90
      %s122 = sphi 0, %s124
      %s125 = sphi 0, %s122
      %s126 = sphi 0, %s125
      %s142 = sphi 0, %s126
      %s146 = sphi 0, %s146
      %s148 = sphi 0, %s146
      %s149 = sphi 0, %s148
      %s163 = sphi 0, %s149
      %s167 = sphi 0, %s167
      %s169 = sphi 0, %s167
      %s170 = sphi 0, %s169
      %s184 = sphi 0, %s170
      %s188 = sphi 0, %s188
      %s190 = sphi 0, %s188
      %s191 = sphi 0, %s190
      %s205 = sphi 0, %s191
      %s209 = sphi 0, %s209
      %s211 = sphi 0, %s209
      %s212 = sphi 0, %s211
      %s226 = sphi 0, %s212
      %s230 = sphi 0, %s230
      %s232 = sphi 0, %s230
      %s233 = sphi 0, %s232
      %s247 = sphi 0, %s233
      %s251 = sphi 0, %s251
      %s253 = sphi 0, %s251
      %s254 = sphi 0, %s253
      %s268 = sphi 0, %s254
      %s276 = sphi 0, %s278
      %s279 = sphi 0, %s276
      %s280 = sphi 0, %s279
      %s296 = sphi 0, %s280
    $region4: #{tpu_custom_call.1} parent=1 // loop_header_branch
      %29 = sbr.rel (%p27) target = $region8
    $region5: #{tpu_custom_call.1} parent=1 // loop_body
      %s31 = ssub.s32 %s26, 1
      %s32 = ssub.s32 %s26, 2
      %s39 = sadd.s32 1, %s34
      %p40 = scmp.ge.s32.totalorder %s39, 1
      %s41 = scalar_select %p40, 0, %s39
      %s42 = sadd.s32 1, %s33
      %s43 = scalar_select %p40, %s42, %s33
      %p44 = scmp.ge.s32.totalorder %s43, 2
      %s45 = scalar_select %p44, 0, %s43
      %s46 = ssub.s32 %s33, %s45
      %s47 = ssub.s32 %s34, %s41
      %s48 = sor.u32 %s46, %s47
      %p49 = scmp.eq.s32.totalorder %s48, 0
      %s51 = sadd.s32 %s50, 1
      %s52 = scalar_select %p49, %s50, %s51
      %p55 = pneg %p49
      %p56 = scmp.eq.s32.totalorder %s26, 1
      %p57 = por %p55, %p56
      %p58 = scmp.ne.s32.totalorder %s50, %s53
      %p59 = scmp.eq.s32.totalorder %s26, 0
      %p60 = por %p58, %p59
      %p61 = scmp.ne.s32.totalorder %s50, %s53
      %p62 = scmp.eq.s32.totalorder %s31, 1
      %p63 = por %p61, %p62
      %p64 = scmp.ne.s32.totalorder %s53, %s54
      %p65 = scmp.eq.s32.totalorder %s31, 0
      %p66 = por %p64, %p65
      %p67 = scmp.ne.s32.totalorder %s53, %s54
      %p68 = scmp.eq.s32.totalorder %s32, 1
      %p69 = por %p67, %p68
      %p71 = scmp.ne.s32.totalorder %s54, %s70
      %p72 = scmp.eq.s32.totalorder %s32, 0
      %p73 = por %p71, %p72
      %s74 = smul.u32 %s34, 2
      %s75 = ssub.s32 %s74, 1
      %p76 = scmp.gt.s32.totalorder %s75, 0
      %s77 = scalar_select %p76, %s75, 0
      %s78 = smul.u32 %s41, 2
      %s79 = ssub.s32 %s78, 1
      %p80 = scmp.gt.s32.totalorder %s79, 0
      %s81 = scalar_select %p80, %s79, 0
      %s82 = ssub.s32 %s33, %s45
      %s83 = ssub.s32 %s77, %s81
      %s84 = sor.u32 %s82, %s83
      %p85 = scmp.eq.s32.totalorder %s84, 0
      %s87 = sadd.s32 %s86, 1
      %s88 = scalar_select %p85, %s86, %s87
      %p91 = pneg %p85
      %p92 = scmp.eq.s32.totalorder %s26, 1
      %p93 = por %p91, %p92
      %p94 = scmp.ne.s32.totalorder %s86, %s89
      %p95 = scmp.eq.s32.totalorder %s26, 0
      %p96 = por %p94, %p95
      %p97 = scmp.ne.s32.totalorder %s86, %s89
      %p98 = scmp.eq.s32.totalorder %s31, 1
      %p99 = por %p97, %p98
      %p100 = scmp.ne.s32.totalorder %s89, %s90
      %p101 = scmp.eq.s32.totalorder %s31, 0
      %p102 = por %p100, %p101
      %p103 = scmp.ne.s32.totalorder %s89, %s90
      %p104 = scmp.eq.s32.totalorder %s32, 1
      %p105 = por %p103, %p104
      %p107 = scmp.ne.s32.totalorder %s90, %s106
      %p108 = scmp.eq.s32.totalorder %s32, 0
      %p109 = por %p107, %p108
      %s110 = sadd.s32 %s34, 1
      %s111 = smul.u32 %s110, 2
      %p112 = scmp.lt.s32.totalorder %s111, 1
      %s113 = scalar_select %p112, %s111, 1
      %s114 = sadd.s32 %s41, 1
      %s115 = smul.u32 %s114, 2
      %p116 = scmp.lt.s32.totalorder %s115, 1
      %s117 = scalar_select %p116, %s115, 1
      %s118 = ssub.s32 %s33, %s45
      %s119 = ssub.s32 %s113, %s117
      %s120 = sor.u32 %s118, %s119
      %p121 = scmp.eq.s32.totalorder %s120, 0
      %s123 = sadd.s32 %s122, 1
      %s124 = scalar_select %p121, %s122, %s123
      %p127 = pneg %p121
      %p128 = scmp.eq.s32.totalorder %s26, 1
      %p129 = por %p127, %p128
      %p130 = scmp.ne.s32.totalorder %s122, %s125
      %p131 = scmp.eq.s32.totalorder %s26, 0
      %p132 = por %p130, %p131
      %p133 = scmp.ne.s32.totalorder %s122, %s125
      %p134 = scmp.eq.s32.totalorder %s31, 1
      %p135 = por %p133, %p134
      %p136 = scmp.ne.s32.totalorder %s125, %s126
      %p137 = scmp.eq.s32.totalorder %s31, 0
      %p138 = por %p136, %p137
      %p139 = scmp.ne.s32.totalorder %s125, %s126
      %p140 = scmp.eq.s32.totalorder %s32, 1
      %p141 = por %p139, %p140
      %p143 = scmp.ne.s32.totalorder %s126, %s142
      %p144 = scmp.eq.s32.totalorder %s32, 0
      %p145 = por %p143, %p144
      %s147 = sadd.s32 %s146, 1
      %p150 = scmp.eq.s32.totalorder %s26, 1
      %p151 = scmp.ne.s32.totalorder %s146, %s148
      %p152 = scmp.eq.s32.totalorder %s26, 0
      %p153 = por %p151, %p152
      %p154 = scmp.ne.s32.totalorder %s146, %s148
      %p155 = scmp.eq.s32.totalorder %s31, 1
      %p156 = por %p154, %p155
      %p157 = scmp.ne.s32.totalorder %s148, %s149
      %p158 = scmp.eq.s32.totalorder %s31, 0
      %p159 = por %p157, %p158
      %p160 = scmp.ne.s32.totalorder %s148, %s149
      %p161 = scmp.eq.s32.totalorder %s32, 1
      %p162 = por %p160, %p161
      %p164 = scmp.ne.s32.totalorder %s149, %s163
      %p165 = scmp.eq.s32.totalorder %s32, 0
      %p166 = por %p164, %p165
      %s168 = sadd.s32 %s167, 1
      %p171 = scmp.eq.s32.totalorder %s26, 1
      %p172 = scmp.ne.s32.totalorder %s167, %s169
      %p173 = scmp.eq.s32.totalorder %s26, 0
      %p174 = por %p172, %p173
      %p175 = scmp.ne.s32.totalorder %s167, %s169
      %p176 = scmp.eq.s32.totalorder %s31, 1
      %p177 = por %p175, %p176
      %p178 = scmp.ne.s32.totalorder %s169, %s170
      %p179 = scmp.eq.s32.totalorder %s31, 0
      %p180 = por %p178, %p179
      %p181 = scmp.ne.s32.totalorder %s169, %s170
      %p182 = scmp.eq.s32.totalorder %s32, 1
      %p183 = por %p181, %p182
      %p185 = scmp.ne.s32.totalorder %s170, %s184
      %p186 = scmp.eq.s32.totalorder %s32, 0
      %p187 = por %p185, %p186
      %s189 = sadd.s32 %s188, 1
      %p192 = scmp.eq.s32.totalorder %s26, 1
      %p193 = scmp.ne.s32.totalorder %s188, %s190
      %p194 = scmp.eq.s32.totalorder %s26, 0
      %p195 = por %p193, %p194
      %p196 = scmp.ne.s32.totalorder %s188, %s190
      %p197 = scmp.eq.s32.totalorder %s31, 1
      %p198 = por %p196, %p197
      %p199 = scmp.ne.s32.totalorder %s190, %s191
      %p200 = scmp.eq.s32.totalorder %s31, 0
      %p201 = por %p199, %p200
      %p202 = scmp.ne.s32.totalorder %s190, %s191
      %p203 = scmp.eq.s32.totalorder %s32, 1
      %p204 = por %p202, %p203
      %p206 = scmp.ne.s32.totalorder %s191, %s205
      %p207 = scmp.eq.s32.totalorder %s32, 0
      %p208 = por %p206, %p207
      %s210 = sadd.s32 %s209, 1
      %p213 = scmp.eq.s32.totalorder %s26, 1
      %p214 = scmp.ne.s32.totalorder %s209, %s211
      %p215 = scmp.eq.s32.totalorder %s26, 0
      %p216 = por %p214, %p215
      %p217 = scmp.ne.s32.totalorder %s209, %s211
      %p218 = scmp.eq.s32.totalorder %s31, 1
      %p219 = por %p217, %p218
      %p220 = scmp.ne.s32.totalorder %s211, %s212
      %p221 = scmp.eq.s32.totalorder %s31, 0
      %p222 = por %p220, %p221
      %p223 = scmp.ne.s32.totalorder %s211, %s212
      %p224 = scmp.eq.s32.totalorder %s32, 1
      %p225 = por %p223, %p224
      %p227 = scmp.ne.s32.totalorder %s212, %s226
      %p228 = scmp.eq.s32.totalorder %s32, 0
      %p229 = por %p227, %p228
      %s231 = sadd.s32 %s230, 1
      %p234 = scmp.eq.s32.totalorder %s26, 1
      %p235 = scmp.ne.s32.totalorder %s230, %s232
      %p236 = scmp.eq.s32.totalorder %s26, 0
      %p237 = por %p235, %p236
      %p238 = scmp.ne.s32.totalorder %s230, %s232
      %p239 = scmp.eq.s32.totalorder %s31, 1
      %p240 = por %p238, %p239
      %p241 = scmp.ne.s32.totalorder %s232, %s233
      %p242 = scmp.eq.s32.totalorder %s31, 0
      %p243 = por %p241, %p242
      %p244 = scmp.ne.s32.totalorder %s232, %s233
      %p245 = scmp.eq.s32.totalorder %s32, 1
      %p246 = por %p244, %p245
      %p248 = scmp.ne.s32.totalorder %s233, %s247
      %p249 = scmp.eq.s32.totalorder %s32, 0
      %p250 = por %p248, %p249
      %s252 = sadd.s32 %s251, 1
      %p255 = scmp.eq.s32.totalorder %s26, 1
      %p256 = scmp.ne.s32.totalorder %s251, %s253
      %p257 = scmp.eq.s32.totalorder %s26, 0
      %p258 = por %p256, %p257
      %p259 = scmp.ne.s32.totalorder %s251, %s253
      %p260 = scmp.eq.s32.totalorder %s31, 1
      %p261 = por %p259, %p260
      %p262 = scmp.ne.s32.totalorder %s253, %s254
      %p263 = scmp.eq.s32.totalorder %s31, 0
      %p264 = por %p262, %p263
      %p265 = scmp.ne.s32.totalorder %s253, %s254
      %p266 = scmp.eq.s32.totalorder %s32, 1
      %p267 = por %p265, %p266
      %p269 = scmp.ne.s32.totalorder %s254, %s268
      %p270 = scmp.eq.s32.totalorder %s32, 0
      %p271 = por %p269, %p270
      %s272 = ssub.s32 %s33, %s45
      %s273 = ssub.s32 %s34, %s41
      %s274 = sor.u32 %s272, %s273
      %p275 = scmp.eq.s32.totalorder %s274, 0
      %s277 = sadd.s32 %s276, 1
      %s278 = scalar_select %p275, %s276, %s277
      %p281 = pneg %p275
      %p282 = scmp.eq.s32.totalorder %s26, 1
      %p283 = por %p281, %p282
      %p284 = scmp.ne.s32.totalorder %s276, %s279
      %p285 = scmp.eq.s32.totalorder %s26, 0
      %p286 = por %p284, %p285
      %p287 = scmp.ne.s32.totalorder %s276, %s279
      %p288 = scmp.eq.s32.totalorder %s31, 1
      %p289 = por %p287, %p288
      %p290 = scmp.ne.s32.totalorder %s279, %s280
      %p291 = scmp.eq.s32.totalorder %s31, 0
      %p292 = por %p290, %p291
      %p293 = scmp.ne.s32.totalorder %s279, %s280
      %p294 = scmp.eq.s32.totalorder %s32, 1
      %p295 = por %p293, %p294
      %p297 = scmp.ne.s32.totalorder %s280, %s296
      %p298 = scmp.eq.s32.totalorder %s32, 0
      %p299 = por %p297, %p298
      %p300 = scmp.le.s32.totalorder 1, %s26
      %p301 = scmp.lt.s32.totalorder %s26, 3
      %p302 = pnand %p300, %p301
      %p303 = pneg %p302
      // Predicated region
      $region9: #{tpu_custom_call.1} parent=5 // pred_check
        _
      $region10: #{tpu_custom_call.1} parent=5 // pred_check_branch
        %305 = sbr.rel (%p302) target = $region12
      $region11: #{tpu_custom_call.1} parent=5 // pred_region
        %s306 = ssub.s32 %s26, 1
        // Predicated region
        $region13: #{tpu_custom_call.1} parent=11 // pred_check
          %p307 = pneg %p159
        $region14: #{tpu_custom_call.1} parent=11 // pred_check_branch
          %309 = sbr.rel (%p307) target = $region16
        $region15: #{tpu_custom_call.1} parent=11 // pred_region
          %s311 = ssub.s32 256, 256
          %312 = vsyncadd [#allocation9], %s311
          %s313 = sshll.u32 [#allocation8], 4
          %s314 = int_to_ptr.vmem [resolvable:$true] %s313
          %319 = dma.hbm_to_vmem [thread:$0]  %s3, 256, %s314, [#allocation9], 64, 64, 4
        $region16: #{tpu_custom_call.1} parent=11 // pred_fallthru
          _
        // Predicated region
        $region17: #{tpu_custom_call.1} parent=11 // pred_check
          %p320 = pneg %p180
        $region18: #{tpu_custom_call.1} parent=11 // pred_check_branch
          %322 = sbr.rel (%p320) target = $region20
        $region19: #{tpu_custom_call.1} parent=11 // pred_region
          _
        $region20: #{tpu_custom_call.1} parent=11 // pred_fallthru
          _
        // Predicated region
        $region21: #{tpu_custom_call.1} parent=11 // pred_check
          %p323 = pneg %p201
        $region22: #{tpu_custom_call.1} parent=11 // pred_check_branch
          %325 = sbr.rel (%p323) target = $region24
        $region23: #{tpu_custom_call.1} parent=11 // pred_region
          %s327 = ssub.s32 5120, 5120
          %328 = vsyncadd [#allocation9], %s327
          %s329 = sshll.u32 [#allocation10], 4
          %s330 = int_to_ptr.vmem [resolvable:$true] %s329
          %335 = dma.hbm_to_vmem [thread:$0]  %s5, 5120, %s330, [#allocation9], 64, 64, 4
        $region24: #{tpu_custom_call.1} parent=11 // pred_fallthru
          _
        // Predicated region
        $region25: #{tpu_custom_call.1} parent=11 // pred_check
          %p336 = pneg %p222
        $region26: #{tpu_custom_call.1} parent=11 // pred_check_branch
          %338 = sbr.rel (%p336) target = $region28
        $region27: #{tpu_custom_call.1} parent=11 // pred_region
          _
        $region28: #{tpu_custom_call.1} parent=11 // pred_fallthru
          _
        // Predicated region
        $region29: #{tpu_custom_call.1} parent=11 // pred_check
          %p339 = pneg %p243
        $region30: #{tpu_custom_call.1} parent=11 // pred_check_branch
          %341 = sbr.rel (%p339) target = $region32
        $region31: #{tpu_custom_call.1} parent=11 // pred_region
          %s343 = ssub.s32 1024, 1024
          %344 = vsyncadd [#allocation12], %s343
          %s345 = sshll.u32 [#allocation11], 4
          %s346 = int_to_ptr.vmem [resolvable:$true] %s345
          %351 = dma.hbm_to_vmem [thread:$0]  %s7, 1024, %s346, [#allocation12], 64, 64, 4
        $region32: #{tpu_custom_call.1} parent=11 // pred_fallthru
          _
        // Predicated region
        $region33: #{tpu_custom_call.1} parent=11 // pred_check
          %p352 = pneg %p264
        $region34: #{tpu_custom_call.1} parent=11 // pred_check_branch
          %354 = sbr.rel (%p352) target = $region36
        $region35: #{tpu_custom_call.1} parent=11 // pred_region
          _
        $region36: #{tpu_custom_call.1} parent=11 // pred_fallthru
          _
      $region12: #{tpu_custom_call.1} parent=5 // pred_fallthru
        _
      %p355 = scmp.lt.s32.totalorder %s26, 2
      // Predicated region
      $region37: #{tpu_custom_call.1} parent=5 // pred_check
        %p356 = pneg %p355
      $region38: #{tpu_custom_call.1} parent=5 // pred_check_branch
        %358 = sbr.rel (%p356) target = $region40
      $region39: #{tpu_custom_call.1} parent=5 // pred_region
        // Predicated region
        $region41: #{tpu_custom_call.1} parent=39 // pred_check
          %p359 = pneg %p60
        $region42: #{tpu_custom_call.1} parent=39 // pred_check_branch
          %361 = sbr.rel (%p359) target = $region44
        $region43: #{tpu_custom_call.1} parent=39 // pred_region
          %s362 = sand.u32 %s50, 1
          %s363 = scalar_lea.sflag [#allocation3], %s362
          %s364 = sand.u32 %s50, 1
          %s365 = smul.addr %s364, 16
          %s366 = scalar_lea.vmem [#allocation2], %s365
          %s367 = smul.u32 2, %s34
          %s369 = ssub.s32 256, 256
          %370 = vsyncadd %s363, %s369
          %s371 = smul.addr %s33, 2
          %s372 = sadd.s32 %s367, %s371
          %s373 = smul.addr %s372, 128
          %s374 = scalar_lea.hbm %s0, %s373
          %s375 = sshll.u32 %s366, 4
          %s376 = int_to_ptr.vmem [resolvable:$true] %s375
          %381 = dma.hbm_to_vmem [thread:$0]  %s374, 256, %s376, %s363, 128, 128, 8
        $region44: #{tpu_custom_call.1} parent=39 // pred_fallthru
          _
        // Predicated region
        $region45: #{tpu_custom_call.1} parent=39 // pred_check
          %p382 = pneg %p96
        $region46: #{tpu_custom_call.1} parent=39 // pred_check_branch
          %384 = sbr.rel (%p382) target = $region48
        $region47: #{tpu_custom_call.1} parent=39 // pred_region
          %s385 = sand.u32 %s26, 1
          %s386 = scalar_lea.sflag [#allocation6], %s385
          %s387 = sand.u32 %s86, 1
          %s388 = smul.addr %s387, 8
          %s389 = scalar_lea.vmem [#allocation5], %s388
          %s390 = smul.u32 %s34, 2
          %s391 = ssub.s32 %s390, 1
          %p392 = scmp.gt.s32.totalorder %s391, 0
          %s393 = scalar_select %p392, %s391, 0
          %s395 = ssub.s32 128, 128
          %396 = vsyncadd %s386, %s395
          %s397 = smul.addr %s33, 2
          %s398 = sadd.s32 %s393, %s397
          %s399 = smul.addr %s398, 128
          %s400 = scalar_lea.hbm %s1, %s399
          %s402 = sshll.u32 %s389, 4
          %s403 = int_to_ptr.vmem [resolvable:$true] %s402
          %405 = dma.hbm_to_vmem [thread:$0]  %s400, 128, %s403, %s386
        $region48: #{tpu_custom_call.1} parent=39 // pred_fallthru
          _
        // Predicated region
        $region49: #{tpu_custom_call.1} parent=39 // pred_check
          %p406 = pneg %p132
        $region50: #{tpu_custom_call.1} parent=39 // pred_check_branch
          %408 = sbr.rel (%p406) target = $region52
        $region51: #{tpu_custom_call.1} parent=39 // pred_region
          %s409 = sand.u32 %s26, 1
          %s410 = scalar_lea.sflag [#allocation6], %s409
          %s411 = sand.u32 %s122, 1
          %s412 = smul.addr %s411, 8
          %s413 = scalar_lea.vmem [#allocation7], %s412
          %s414 = sadd.s32 %s34, 1
          %s415 = smul.u32 %s414, 2
          %p416 = scmp.lt.s32.totalorder %s415, 1
          %s417 = scalar_select %p416, %s415, 1
          %s419 = ssub.s32 128, 128
          %420 = vsyncadd %s410, %s419
          %s421 = smul.addr %s33, 2
          %s422 = sadd.s32 %s417, %s421
          %s423 = smul.addr %s422, 128
          %s424 = scalar_lea.hbm %s2, %s423
          %s426 = sshll.u32 %s413, 4
          %s427 = int_to_ptr.vmem [resolvable:$true] %s426
          %429 = dma.hbm_to_vmem [thread:$0]  %s424, 128, %s427, %s410
        $region52: #{tpu_custom_call.1} parent=39 // pred_fallthru
          _
      $region40: #{tpu_custom_call.1} parent=5 // pred_fallthru
        _
      %p430 = scmp.le.s32.totalorder 1, %s26
      %p431 = scmp.lt.s32.totalorder %s26, 3
      %p432 = pnand %p430, %p431
      %p433 = pneg %p432
      // Predicated region
      $region53: #{tpu_custom_call.1} parent=5 // pred_check
        _
      $region54: #{tpu_custom_call.1} parent=5 // pred_check_branch
        %435 = sbr.rel (%p432) target = $region56
      $region55: #{tpu_custom_call.1} parent=5 // pred_region
        %s436 = ssub.s32 %s26, 1
        %s437 = sand.u32 %s53, 1
        %s438 = scalar_lea.sflag [#allocation3], %s437
        %s439 = sand.u32 %s53, 1
        %s440 = smul.addr %s439, 16
        %s441 = scalar_lea.vmem [#allocation2], %s440
        // Predicated region
        $region57: #{tpu_custom_call.1} parent=55 // pred_check
          %p442 = pneg %p66
        $region58: #{tpu_custom_call.1} parent=55 // pred_check_branch
          %444 = sbr.rel (%p442) target = $region60
        $region59: #{tpu_custom_call.1} parent=55 // pred_region
          %445 = dma.done %s438, 256
        $region60: #{tpu_custom_call.1} parent=55 // pred_fallthru
          _
        %s446 = sand.u32 %s31, 1
        %s447 = scalar_lea.sflag [#allocation6], %s446
        %s448 = sand.u32 %s89, 1
        %s449 = smul.addr %s448, 8
        %s450 = scalar_lea.vmem [#allocation5], %s449
        // Predicated region
        $region61: #{tpu_custom_call.1} parent=55 // pred_check
          %p451 = pneg %p102
        $region62: #{tpu_custom_call.1} parent=55 // pred_check_branch
          %453 = sbr.rel (%p451) target = $region64
        $region63: #{tpu_custom_call.1} parent=55 // pred_region
          %454 = dma.done %s447, 128
        $region64: #{tpu_custom_call.1} parent=55 // pred_fallthru
          _
        %s455 = sand.u32 %s31, 1
        %s456 = scalar_lea.sflag [#allocation6], %s455
        %s457 = sand.u32 %s125, 1
        %s458 = smul.addr %s457, 8
        %s459 = scalar_lea.vmem [#allocation7], %s458
        // Predicated region
        $region65: #{tpu_custom_call.1} parent=55 // pred_check
          %p460 = pneg %p138
        $region66: #{tpu_custom_call.1} parent=55 // pred_check_branch
          %462 = sbr.rel (%p460) target = $region68
        $region67: #{tpu_custom_call.1} parent=55 // pred_region
          %463 = dma.done %s456, 128
        $region68: #{tpu_custom_call.1} parent=55 // pred_fallthru
          _
        // Predicated region
        $region69: #{tpu_custom_call.1} parent=55 // pred_check
          %p464 = pneg %p159
        $region70: #{tpu_custom_call.1} parent=55 // pred_check_branch
          %466 = sbr.rel (%p464) target = $region72
        $region71: #{tpu_custom_call.1} parent=55 // pred_region
          %467 = dma.done [#allocation9], 256
        $region72: #{tpu_custom_call.1} parent=55 // pred_fallthru
          _
        // Predicated region
        $region73: #{tpu_custom_call.1} parent=55 // pred_check
          %p468 = pneg %p201
        $region74: #{tpu_custom_call.1} parent=55 // pred_check_branch
          %470 = sbr.rel (%p468) target = $region76
        $region75: #{tpu_custom_call.1} parent=55 // pred_region
          %471 = dma.done [#allocation9], 5120
        $region76: #{tpu_custom_call.1} parent=55 // pred_fallthru
          _
        // Predicated region
        $region77: #{tpu_custom_call.1} parent=55 // pred_check
          %p472 = pneg %p243
        $region78: #{tpu_custom_call.1} parent=55 // pred_check_branch
          %474 = sbr.rel (%p472) target = $region80
        $region79: #{tpu_custom_call.1} parent=55 // pred_region
          %475 = dma.done [#allocation12], 1024
        $region80: #{tpu_custom_call.1} parent=55 // pred_fallthru
          _
        %s476 = sand.u32 %s53, 1
        %s477 = scalar_lea.sflag [#allocation3], %s476
        %s478 = sand.u32 %s53, 1
        %s479 = smul.addr %s478, 16
        %s480 = scalar_lea.vmem [#allocation2], %s479
        %p481 = pneg %p66
        %p482 = pneg %p63
        %s483 = sand.u32 %s31, 1
        %s484 = scalar_lea.sflag [#allocation6], %s483
        %s485 = sand.u32 %s89, 1
        %s486 = smul.addr %s485, 8
        %s487 = scalar_lea.vmem [#allocation5], %s486
        %p488 = pneg %p102
        %p489 = pneg %p99
        %s490 = sand.u32 %s31, 1
        %s491 = scalar_lea.sflag [#allocation6], %s490
        %s492 = sand.u32 %s125, 1
        %s493 = smul.addr %s492, 8
        %s494 = scalar_lea.vmem [#allocation7], %s493
        %p495 = pneg %p138
        %p496 = pneg %p135
        %p497 = pneg %p159
        %p498 = pneg %p156
        %p499 = pneg %p180
        %p500 = pneg %p177
        %p501 = pneg %p201
        %p502 = pneg %p198
        %p503 = pneg %p222
        %p504 = pneg %p219
        %p505 = pneg %p243
        %p506 = pneg %p240
        %p507 = pneg %p264
        %p508 = pneg %p261
        %p509 = pneg %p292
        %p510 = pneg %p289
        %s511 = sand.u32 %s279, 1
        %s512 = scalar_lea.sflag [#allocation4], %s511
        %s513 = sand.u32 %s279, 1
        %s514 = smul.addr %s513, 16
        %s515 = scalar_lea.vmem [#allocation13], %s514
        %s516 = smul.u32 2, %s36
        %s517 = smul.u32 %s36, 2
        %s518 = ssub.s32 %s517, 1
        %p519 = scmp.gt.s32.totalorder %s518, 0
        %s520 = scalar_select %p519, %s518, 0
        %s521 = sadd.s32 %s36, 1
        %s522 = smul.u32 %s521, 2
        %p523 = scmp.lt.s32.totalorder %s522, 1
        %s524 = scalar_select %p523, %s522, 1
        %s525 = smul.u32 2, %s36
        %v527 = vld [vmem:[%s450] sm:$0xff]
        %v528 = vpack.c.bf16 %v527, %v527
        %v529 = vld [vmem:[%s441] sm:$0xff]
        %v530 = vld [vmem:[%s441 + $0x8] sm:$0xff]
        %v531 = vpack.c.bf16 %v530, %v529
        %v532 = vld [vmem:[%s459] sm:$0xff]
        %v533 = vpack.c.bf16 %v532, %v532
        %v535 = vrot.slane %v531, 4
        %v537 = vrot.slane %v533, 4
        %vm538 = vcmask 1043456
        %v541 = vsel %vm538, %v528, %v535
        %v543 = vsel %vm538, %v535, %v537
        %v544 = vld [vmem:[#allocation8] sm:$0xf]
        %v545 = vld [vmem:[#allocation8 + $0x4] sm:$0xf]
        %v546 = vld [vmem:[#allocation8 + $0x8] sm:$0xf]
        %v547 = vld [vmem:[#allocation8 + $0xc] sm:$0xf]
        %v548 = vld [vmem:[%s4] sm:$0x1]
        %v550 = vlaneseq
        %v551 = vshrl.u32 %v550, 7
        %v552 = vsub.s32 0, %v551
        %v553 = vrot.slane %v548, %v552
        %v559 = vunpack.c.l.b16 %v544
        %v560 = vunpack.c.l.b16 %v545
        %v561 = vunpack.c.l.b16 %v546
        %v562 = vunpack.c.l.b16 %v547
        %v563 = vpack.c.b16 %v560, %v559
        %v564 = vpack.c.b16 %v562, %v561
        %vm567 = vcmask 261120
        %v568 = vsel %vm567, %v541, 0
        %v570 = vsel %vm567, %v543, 0
        %572 = vmatprep.subr.bf16.mxu0 0
        %573 = vmatpush1.bf16.msra.mxu0 %v563
        %574 = vmatprep.subr.bf16.mxu0 0
        %575 = vmatpush1.bf16.msra.mxu0 %v564
        %576 = vmatprep.subr.bf16.mxu0 0
        %577 = vmatpush1.bf16.msra.mxu0 0
        %578 = vmatprep.subr.bf16.mxu0 0
        %579 = vmatpush1.bf16.msra.mxu0 0
        %580 = vmatprep.subr.bf16.mxu0 0
        %581 = vmatpush1.bf16.msra.mxu0 0
        %582 = vmatprep.subr.bf16.mxu0 0
        %583 = vmatpush1.bf16.msra.mxu0 0
        %584 = vmatprep.subr.bf16.mxu0 0
        %585 = vmatpush1.bf16.msra.mxu0 0
        %586 = vmatprep.subr.bf16.mxu0 0
        %587 = vmatpush1.bf16.msra.mxu0 0
        %588 = vmatprep.subr.bf16.mxu0 0
        %589 = vmatpush1.bf16.msra.mxu0 0
        %590 = vmatprep.subr.bf16.mxu0 0
        %591 = vmatpush1.bf16.msra.mxu0 0
        %592 = vmatprep.subr.bf16.mxu0 0
        %593 = vmatpush1.bf16.msra.mxu0 0
        %594 = vmatprep.subr.bf16.mxu0 0
        %595 = vmatpush1.bf16.msra.mxu0 0
        %596 = vmatprep.subr.bf16.mxu0 0
        %597 = vmatpush1.bf16.msra.mxu0 0
        %598 = vmatprep.subr.bf16.mxu0 0
        %599 = vmatpush1.bf16.msra.mxu0 0
        %600 = vmatprep.subr.bf16.mxu0 0
        %601 = vmatpush1.bf16.msra.mxu0 0
        %602 = vmatprep.subr.bf16.mxu0 0
        %603 = vmatpush1.bf16.msra.mxu0 0
        %604 = vmatprep.mubr.bf16.mxu0 0
        %605 = vmatmul.mubr.bf16.gmra.mrb[0].mxu0 %v568
        %v606 = vpop.f32.mrb[0].mxu0
        %v607 = vadd.f32 %v553, %v606
        %v608 = vpop.f32.mrb[0].mxu0
        %v609 = vpop.f32.mrb[0].mxu0
        %v610 = vadd.f32 %v553, %v609
        %v611 = vpop.f32.mrb[0].mxu0
        %612 = vmatprep.mubr.bf16.mxu0 0
        %613 = vmatmul.mubr.bf16.gmra.mrb[0].mxu0 %v570
        %v614 = vpop.f32.mrb[0].mxu0
        %v615 = vadd.f32 %v553, %v614
        %v616 = vpop.f32.mrb[0].mxu0
        %v617 = vpop.f32.mrb[0].mxu0
        %v618 = vadd.f32 %v553, %v617
        %v619 = vpop.f32.mrb[0].mxu0
        %620 = vdwg.mxu0
        %v621 = vmax.f32 %v607, 0.0
        %v622 = vmax.f32 %v610, 0.0
        %v623 = vmax.f32 %v615, 0.0
        %v624 = vmax.f32 %v618, 0.0
        %v625 = vlaneseq
        %v626 = vshrl.u32 %v625, 7
        %v627 = vadd.s32 %v626, 8
        %v628 = vadd.s32 %v626, 16
        %v629 = vadd.s32 %v626, 24
        %s630 = smul.u32 %s36, 16
        %v631 = vstv %s630
        %v632 = vadd.s32 %v631, %v626
        %v633 = vadd.s32 %v631, %v627
        %v634 = vadd.s32 %v631, %v628
        %v635 = vadd.s32 %v631, %v629
        %v636 = vsub.s32 %v632, 8
        %v637 = vsub.s32 %v633, 8
        %v638 = vsub.s32 %v634, 8
        %v639 = vsub.s32 %v635, 8
        %vm640 = vcmp.ge.s32.totalorder %v636, 0
        %vm641 = vcmp.ge.s32.totalorder %v637, 0
        %vm642 = vcmp.ge.s32.totalorder %v638, 0
        %vm643 = vcmp.ge.s32.totalorder %v639, 0
        %vm644 = vcmp.lt.s32.totalorder %v636, 16
        %vm645 = vcmp.lt.s32.totalorder %v637, 16
        %vm646 = vcmp.lt.s32.totalorder %v638, 16
        %vm647 = vcmp.lt.s32.totalorder %v639, 16
        %vm648 = vmand %vm640, %vm644
        %vm649 = vmand %vm641, %vm645
        %vm650 = vmand %vm642, %vm646
        %vm651 = vmand %vm643, %vm647
        %v652 = vsel %vm648, 1, 0
        %v653 = vsel %vm649, 1, 0
        %v654 = vsel %vm650, 1, 0
        %v655 = vsel %vm651, 1, 0
        %vm656 = vcmp.eq.s32.totalorder %v652, 1
        %vm657 = vcmp.eq.s32.totalorder %v653, 1
        %vm658 = vcmp.eq.s32.totalorder %v654, 1
        %vm659 = vcmp.eq.s32.totalorder %v655, 1
        %v660 = vsel %vm656, %v621, 0.0
        %v661 = vsel %vm657, %v622, 0.0
        %v662 = vsel %vm658, %v623, 0.0
        %v663 = vsel %vm659, %v624, 0.0
        %v664 = vpack.c.bf16 %v661, %v660
        %v665 = vpack.c.bf16 %v663, %v662
        %vm666 = vsmask.f32 7424
        %v668 = vshrl.u32 %v664, 16
        %v670 = vshll.u32 %v664, 16
        %v672 = vrot.slane %v670, 1
        %v673 = vor.u32 %v668, %v672
        %v675 = vshll.u32 %v665, 16
        %v677 = vrot.slane %v675, 1
        %v678 = vsel %vm666, %v673, %v677
        %v679 = vshrl.u32 %v665, 16
        %v681 = vor.u32 %v679, %v677
        %vm684 = vcmask 1046528
        %v685 = vrot.slane %v664, 1
        %v686 = vrot.slane %v665, 1
        %v687 = vsel %vm684, %v685, %v686
        %vm688 = vsmask.f32 6400
        %v689 = vrot.slane %v668, 1
        %v690 = vrot.slane %v670, 2
        %v691 = vor.u32 %v689, %v690
        %v692 = vrot.slane %v679, 1
        %v693 = vrot.slane %v675, 2
        %v694 = vor.u32 %v692, %v693
        %v695 = vsel %vm688, %v691, %v694
        %vm696 = vcmask 1045504
        %v697 = vrot.slane %v664, 2
        %v698 = vrot.slane %v665, 2
        %v699 = vsel %vm696, %v697, %v698
        %v700 = vld [vmem:[#allocation10] sm:$0xf]
        %v701 = vld [vmem:[#allocation10 + $0x4] sm:$0xf]
        %v702 = vld [vmem:[#allocation10 + $0x8] sm:$0xf]
        %v703 = vld [vmem:[#allocation10 + $0xc] sm:$0xf]
        %v704 = vld [vmem:[#allocation10 + $0x10] sm:$0xf]
        %v705 = vld [vmem:[#allocation10 + $0x14] sm:$0xf]
        %v706 = vld [vmem:[#allocation10 + $0x18] sm:$0xf]
        %v707 = vld [vmem:[#allocation10 + $0x1c] sm:$0xf]
        %v708 = vld [vmem:[#allocation10 + $0x20] sm:$0xf]
        %v709 = vld [vmem:[#allocation10 + $0x24] sm:$0xf]
        %v710 = vld [vmem:[#allocation10 + $0x28] sm:$0xf]
        %v711 = vld [vmem:[#allocation10 + $0x2c] sm:$0xf]
        %v712 = vld [vmem:[#allocation10 + $0x30] sm:$0xf]
        %v713 = vld [vmem:[#allocation10 + $0x34] sm:$0xf]
        %v714 = vld [vmem:[#allocation10 + $0x38] sm:$0xf]
        %v715 = vld [vmem:[#allocation10 + $0x3c] sm:$0xf]
        %v716 = vld [vmem:[#allocation10 + $0x40] sm:$0xf]
        %v717 = vld [vmem:[#allocation10 + $0x44] sm:$0xf]
        %v718 = vld [vmem:[#allocation10 + $0x48] sm:$0xf]
        %v719 = vld [vmem:[#allocation10 + $0x4c] sm:$0xf]
        %v720 = vld [vmem:[#allocation10 + $0x50] sm:$0xf]
        %v721 = vld [vmem:[#allocation10 + $0x54] sm:$0xf]
        %v722 = vld [vmem:[#allocation10 + $0x58] sm:$0xf]
        %v723 = vld [vmem:[#allocation10 + $0x5c] sm:$0xf]
        %v724 = vld [vmem:[#allocation10 + $0x60] sm:$0xf]
        %v725 = vld [vmem:[#allocation10 + $0x64] sm:$0xf]
        %v726 = vld [vmem:[#allocation10 + $0x68] sm:$0xf]
        %v727 = vld [vmem:[#allocation10 + $0x6c] sm:$0xf]
        %v728 = vld [vmem:[#allocation10 + $0x70] sm:$0xf]
        %v729 = vld [vmem:[#allocation10 + $0x74] sm:$0xf]
        %v730 = vld [vmem:[#allocation10 + $0x78] sm:$0xf]
        %v731 = vld [vmem:[#allocation10 + $0x7c] sm:$0xf]
        %v732 = vld [vmem:[#allocation10 + $0x80] sm:$0xf]
        %v733 = vld [vmem:[#allocation10 + $0x84] sm:$0xf]
        %v734 = vld [vmem:[#allocation10 + $0x88] sm:$0xf]
        %v735 = vld [vmem:[#allocation10 + $0x8c] sm:$0xf]
        %v736 = vld [vmem:[#allocation10 + $0x90] sm:$0xf]
        %v737 = vld [vmem:[#allocation10 + $0x94] sm:$0xf]
        %v738 = vld [vmem:[#allocation10 + $0x98] sm:$0xf]
        %v739 = vld [vmem:[#allocation10 + $0x9c] sm:$0xf]
        %v740 = vld [vmem:[#allocation10 + $0xa0] sm:$0xf]
        %v741 = vld [vmem:[#allocation10 + $0xa4] sm:$0xf]
        %v742 = vld [vmem:[#allocation10 + $0xa8] sm:$0xf]
        %v743 = vld [vmem:[#allocation10 + $0xac] sm:$0xf]
        %v744 = vld [vmem:[#allocation10 + $0xb0] sm:$0xf]
        %v745 = vld [vmem:[#allocation10 + $0xb4] sm:$0xf]
        %v746 = vld [vmem:[#allocation10 + $0xb8] sm:$0xf]
        %v747 = vld [vmem:[#allocation10 + $0xbc] sm:$0xf]
        %v748 = vld [vmem:[#allocation10 + $0xc0] sm:$0xf]
        %v749 = vld [vmem:[#allocation10 + $0xc4] sm:$0xf]
        %v750 = vld [vmem:[#allocation10 + $0xc8] sm:$0xf]
        %v751 = vld [vmem:[#allocation10 + $0xcc] sm:$0xf]
        %v752 = vld [vmem:[#allocation10 + $0xd0] sm:$0xf]
        %v753 = vld [vmem:[#allocation10 + $0xd4] sm:$0xf]
        %v754 = vld [vmem:[#allocation10 + $0xd8] sm:$0xf]
        %v755 = vld [vmem:[#allocation10 + $0xdc] sm:$0xf]
        %v756 = vld [vmem:[#allocation10 + $0xe0] sm:$0xf]
        %v757 = vld [vmem:[#allocation10 + $0xe4] sm:$0xf]
        %v758 = vld [vmem:[#allocation10 + $0xe8] sm:$0xf]
        %v759 = vld [vmem:[#allocation10 + $0xec] sm:$0xf]
        %v760 = vld [vmem:[#allocation10 + $0xf0] sm:$0xf]
        %v761 = vld [vmem:[#allocation10 + $0xf4] sm:$0xf]
        %v762 = vld [vmem:[#allocation10 + $0xf8] sm:$0xf]
        %v763 = vld [vmem:[#allocation10 + $0xfc] sm:$0xf]
        %v764 = vld [vmem:[#allocation10 + $0x100] sm:$0xf]
        %v765 = vld [vmem:[#allocation10 + $0x104] sm:$0xf]
        %v766 = vld [vmem:[#allocation10 + $0x108] sm:$0xf]
        %v767 = vld [vmem:[#allocation10 + $0x10c] sm:$0xf]
        %v768 = vld [vmem:[#allocation10 + $0x110] sm:$0xf]
        %v769 = vld [vmem:[#allocation10 + $0x114] sm:$0xf]
        %v770 = vld [vmem:[#allocation10 + $0x118] sm:$0xf]
        %v771 = vld [vmem:[#allocation10 + $0x11c] sm:$0xf]
        %v772 = vld [vmem:[#allocation10 + $0x120] sm:$0xf]
        %v773 = vld [vmem:[#allocation10 + $0x124] sm:$0xf]
        %v774 = vld [vmem:[#allocation10 + $0x128] sm:$0xf]
        %v775 = vld [vmem:[#allocation10 + $0x12c] sm:$0xf]
        %v776 = vld [vmem:[#allocation10 + $0x130] sm:$0xf]
        %v777 = vld [vmem:[#allocation10 + $0x134] sm:$0xf]
        %v778 = vld [vmem:[#allocation10 + $0x138] sm:$0xf]
        %v779 = vld [vmem:[#allocation10 + $0x13c] sm:$0xf]
        %v780 = vld [vmem:[%s6] sm:$0x1]
        %v782 = vlaneseq
        %v783 = vshrl.u32 %v782, 7
        %v784 = vsub.s32 0, %v783
        %v785 = vrot.slane %v780, %v784
        %vm787 = vcmask 1044480
        %v788 = vrot.slane %v664, 3
        %v789 = vrot.slane %v665, 3
        %v790 = vsel %vm787, %v788, %v789
        %v791 = vrot.slane %v678, 3
        %v792 = vrot.slane %v681, 3
        %v793 = vsel %vm787, %v791, %v792
        %v794 = vrot.slane %v687, 3
        %v795 = vrot.slane %v686, 3
        %v796 = vsel %vm787, %v794, %v795
        %v797 = vrot.slane %v695, 3
        %v798 = vrot.slane %v694, 3
        %v799 = vsel %vm787, %v797, %v798
        %v800 = vrot.slane %v699, 3
        %v801 = vrot.slane %v698, 3
        %v802 = vsel %vm787, %v800, %v801
        %v888 = vunpack.c.l.b16 %v700
        %v889 = vunpack.c.l.b16 %v701
        %v890 = vunpack.c.l.b16 %v702
        %v891 = vunpack.c.l.b16 %v703
        %v892 = vunpack.c.l.b16 %v704
        %v893 = vunpack.c.l.b16 %v705
        %v894 = vunpack.c.l.b16 %v706
        %v895 = vunpack.c.l.b16 %v707
        %v896 = vunpack.c.l.b16 %v708
        %v897 = vunpack.c.l.b16 %v709
        %v898 = vunpack.c.l.b16 %v710
        %v899 = vunpack.c.l.b16 %v711
        %v900 = vunpack.c.l.b16 %v712
        %v901 = vunpack.c.l.b16 %v713
        %v902 = vunpack.c.l.b16 %v714
        %v903 = vunpack.c.l.b16 %v715
        %v904 = vunpack.c.l.b16 %v716
        %v905 = vunpack.c.l.b16 %v717
        %v906 = vunpack.c.l.b16 %v718
        %v907 = vunpack.c.l.b16 %v719
        %v908 = vunpack.c.l.b16 %v720
        %v909 = vunpack.c.l.b16 %v721
        %v910 = vunpack.c.l.b16 %v722
        %v911 = vunpack.c.l.b16 %v723
        %v912 = vunpack.c.l.b16 %v724
        %v913 = vunpack.c.l.b16 %v725
        %v914 = vunpack.c.l.b16 %v726
        %v915 = vunpack.c.l.b16 %v727
        %v916 = vunpack.c.l.b16 %v728
        %v917 = vunpack.c.l.b16 %v729
        %v918 = vunpack.c.l.b16 %v730
        %v919 = vunpack.c.l.b16 %v731
        %v920 = vunpack.c.l.b16 %v732
        %v921 = vunpack.c.l.b16 %v733
        %v922 = vunpack.c.l.b16 %v734
        %v923 = vunpack.c.l.b16 %v735
        %v924 = vunpack.c.l.b16 %v736
        %v925 = vunpack.c.l.b16 %v737
        %v926 = vunpack.c.l.b16 %v738
        %v927 = vunpack.c.l.b16 %v739
        %v928 = vunpack.c.l.b16 %v740
        %v929 = vunpack.c.l.b16 %v741
        %v930 = vunpack.c.l.b16 %v742
        %v931 = vunpack.c.l.b16 %v743
        %v932 = vunpack.c.l.b16 %v744
        %v933 = vunpack.c.l.b16 %v745
        %v934 = vunpack.c.l.b16 %v746
        %v935 = vunpack.c.l.b16 %v747
        %v936 = vunpack.c.l.b16 %v748
        %v937 = vunpack.c.l.b16 %v749
        %v938 = vunpack.c.l.b16 %v750
        %v939 = vunpack.c.l.b16 %v751
        %v940 = vunpack.c.l.b16 %v752
        %v941 = vunpack.c.l.b16 %v753
        %v942 = vunpack.c.l.b16 %v754
        %v943 = vunpack.c.l.b16 %v755
        %v944 = vunpack.c.l.b16 %v756
        %v945 = vunpack.c.l.b16 %v757
        %v946 = vunpack.c.l.b16 %v758
        %v947 = vunpack.c.l.b16 %v759
        %v948 = vunpack.c.l.b16 %v760
        %v949 = vunpack.c.l.b16 %v761
        %v950 = vunpack.c.l.b16 %v762
        %v951 = vunpack.c.l.b16 %v763
        %v952 = vunpack.c.l.b16 %v764
        %v953 = vunpack.c.l.b16 %v765
        %v954 = vunpack.c.l.b16 %v766
        %v955 = vunpack.c.l.b16 %v767
        %v956 = vunpack.c.l.b16 %v768
        %v957 = vunpack.c.l.b16 %v769
        %v958 = vunpack.c.l.b16 %v770
        %v959 = vunpack.c.l.b16 %v771
        %v960 = vunpack.c.l.b16 %v772
        %v961 = vunpack.c.l.b16 %v773
        %v962 = vunpack.c.l.b16 %v774
        %v963 = vunpack.c.l.b16 %v775
        %v964 = vunpack.c.l.b16 %v776
        %v965 = vunpack.c.l.b16 %v777
        %v966 = vunpack.c.l.b16 %v778
        %v967 = vunpack.c.l.b16 %v779
        %v968 = vpack.c.b16 %v889, %v888
        %v969 = vpack.c.b16 %v891, %v890
        %v970 = vpack.c.b16 %v893, %v892
        %v971 = vpack.c.b16 %v895, %v894
        %v972 = vpack.c.b16 %v897, %v896
        %v973 = vpack.c.b16 %v899, %v898
        %v974 = vpack.c.b16 %v901, %v900
        %v975 = vpack.c.b16 %v903, %v902
        %v976 = vpack.c.b16 %v905, %v904
        %v977 = vpack.c.b16 %v907, %v906
        %v978 = vpack.c.b16 %v909, %v908
        %v979 = vpack.c.b16 %v911, %v910
        %v980 = vpack.c.b16 %v913, %v912
        %v981 = vpack.c.b16 %v915, %v914
        %v982 = vpack.c.b16 %v917, %v916
        %v983 = vpack.c.b16 %v919, %v918
        %v984 = vpack.c.b16 %v921, %v920
        %v985 = vpack.c.b16 %v923, %v922
        %v986 = vpack.c.b16 %v925, %v924
        %v987 = vpack.c.b16 %v927, %v926
        %v988 = vpack.c.b16 %v929, %v928
        %v989 = vpack.c.b16 %v931, %v930
        %v990 = vpack.c.b16 %v933, %v932
        %v991 = vpack.c.b16 %v935, %v934
        %v992 = vpack.c.b16 %v937, %v936
        %v993 = vpack.c.b16 %v939, %v938
        %v994 = vpack.c.b16 %v941, %v940
        %v995 = vpack.c.b16 %v943, %v942
        %v996 = vpack.c.b16 %v945, %v944
        %v997 = vpack.c.b16 %v947, %v946
        %v998 = vpack.c.b16 %v949, %v948
        %v999 = vpack.c.b16 %v951, %v950
        %v1000 = vpack.c.b16 %v953, %v952
        %v1001 = vpack.c.b16 %v955, %v954
        %v1002 = vpack.c.b16 %v957, %v956
        %v1003 = vpack.c.b16 %v959, %v958
        %v1004 = vpack.c.b16 %v961, %v960
        %v1005 = vpack.c.b16 %v963, %v962
        %v1006 = vpack.c.b16 %v965, %v964
        %v1007 = vpack.c.b16 %v967, %v966
        %1048 = vmatprep.subr.bf16.mxu0 0
        %1049 = vmatpush1.bf16.msra.mxu0 %v968
        %1050 = vmatprep.subr.bf16.mxu0 0
        %1051 = vmatpush1.bf16.msra.mxu0 %v969
        %1052 = vmatprep.subr.bf16.mxu0 0
        %1053 = vmatpush1.bf16.msra.mxu0 %v970
        %1054 = vmatprep.subr.bf16.mxu0 0
        %1055 = vmatpush1.bf16.msra.mxu0 %v971
        %1056 = vmatprep.subr.bf16.mxu0 0
        %1057 = vmatpush1.bf16.msra.mxu0 %v972
        %1058 = vmatprep.subr.bf16.mxu0 0
        %1059 = vmatpush1.bf16.msra.mxu0 %v973
        %1060 = vmatprep.subr.bf16.mxu0 0
        %1061 = vmatpush1.bf16.msra.mxu0 %v974
        %1062 = vmatprep.subr.bf16.mxu0 0
        %1063 = vmatpush1.bf16.msra.mxu0 %v975
        %1064 = vmatprep.subr.bf16.mxu0 0
        %1065 = vmatpush1.bf16.msra.mxu0 %v976
        %1066 = vmatprep.subr.bf16.mxu0 0
        %1067 = vmatpush1.bf16.msra.mxu0 %v977
        %1068 = vmatprep.subr.bf16.mxu0 0
        %1069 = vmatpush1.bf16.msra.mxu0 %v978
        %1070 = vmatprep.subr.bf16.mxu0 0
        %1071 = vmatpush1.bf16.msra.mxu0 %v979
        %1072 = vmatprep.subr.bf16.mxu0 0
        %1073 = vmatpush1.bf16.msra.mxu0 %v980
        %1074 = vmatprep.subr.bf16.mxu0 0
        %1075 = vmatpush1.bf16.msra.mxu0 %v981
        %1076 = vmatprep.subr.bf16.mxu0 0
        %1077 = vmatpush1.bf16.msra.mxu0 %v982
        %1078 = vmatprep.subr.bf16.mxu0 0
        %1079 = vmatpush1.bf16.msra.mxu0 %v983
        %1080 = vmatprep.mubr.bf16.mxu0 %v793
        %1081 = vmatmul.mubr.bf16.gmra.mrb[0].mxu0 %v790
        %v1082 = vpop.f32.mrb[0].mxu0
        %v1083 = vadd.f32 %v785, %v1082
        %v1084 = vpop.f32.mrb[0].mxu0
        %v1085 = vpop.f32.mrb[0].mxu0
        %v1086 = vadd.f32 %v785, %v1085
        %v1087 = vpop.f32.mrb[0].mxu0
        %1088 = vdwg.mxu0
        %1089 = vmatprep.subr.bf16.mxu0 0
        %1090 = vmatpush1.bf16.msra.mxu0 %v984
        %1091 = vmatprep.subr.bf16.mxu0 0
        %1092 = vmatpush1.bf16.msra.mxu0 %v985
        %1093 = vmatprep.subr.bf16.mxu0 0
        %1094 = vmatpush1.bf16.msra.mxu0 %v986
        %1095 = vmatprep.subr.bf16.mxu0 0
        %1096 = vmatpush1.bf16.msra.mxu0 %v987
        %1097 = vmatprep.subr.bf16.mxu0 0
        %1098 = vmatpush1.bf16.msra.mxu0 %v988
        %1099 = vmatprep.subr.bf16.mxu0 0
        %1100 = vmatpush1.bf16.msra.mxu0 %v989
        %1101 = vmatprep.subr.bf16.mxu0 0
        %1102 = vmatpush1.bf16.msra.mxu0 %v990
        %1103 = vmatprep.subr.bf16.mxu0 0
        %1104 = vmatpush1.bf16.msra.mxu0 %v991
        %1105 = vmatprep.subr.bf16.mxu0 0
        %1106 = vmatpush1.bf16.msra.mxu0 %v992
        %1107 = vmatprep.subr.bf16.mxu0 0
        %1108 = vmatpush1.bf16.msra.mxu0 %v993
        %1109 = vmatprep.subr.bf16.mxu0 0
        %1110 = vmatpush1.bf16.msra.mxu0 %v994
        %1111 = vmatprep.subr.bf16.mxu0 0
        %1112 = vmatpush1.bf16.msra.mxu0 %v995
        %1113 = vmatprep.subr.bf16.mxu0 0
        %1114 = vmatpush1.bf16.msra.mxu0 %v996
        %1115 = vmatprep.subr.bf16.mxu0 0
        %1116 = vmatpush1.bf16.msra.mxu0 %v997
        %1117 = vmatprep.subr.bf16.mxu0 0
        %1118 = vmatpush1.bf16.msra.mxu0 %v998
        %1119 = vmatprep.subr.bf16.mxu0 0
        %1120 = vmatpush1.bf16.msra.mxu0 %v999
        %1121 = vmatprep.mubr.bf16.mxu0 %v799
        %1122 = vmatmul.mubr.bf16.gmra.mrb[0].mxu0 %v796
        %v1123 = vpop.f32.mrb[0].mxu0
        %v1124 = vadd.f32 %v1083, %v1123
        %v1125 = vpop.f32.mrb[0].mxu0
        %v1126 = vpop.f32.mrb[0].mxu0
        %v1127 = vadd.f32 %v1086, %v1126
        %v1128 = vpop.f32.mrb[0].mxu0
        %1129 = vdwg.mxu0
        %1130 = vmatprep.subr.bf16.mxu0 0
        %1131 = vmatpush1.bf16.msra.mxu0 %v1000
        %1132 = vmatprep.subr.bf16.mxu0 0
        %1133 = vmatpush1.bf16.msra.mxu0 %v1001
        %1134 = vmatprep.subr.bf16.mxu0 0
        %1135 = vmatpush1.bf16.msra.mxu0 %v1002
        %1136 = vmatprep.subr.bf16.mxu0 0
        %1137 = vmatpush1.bf16.msra.mxu0 %v1003
        %1138 = vmatprep.subr.bf16.mxu0 0
        %1139 = vmatpush1.bf16.msra.mxu0 %v1004
        %1140 = vmatprep.subr.bf16.mxu0 0
        %1141 = vmatpush1.bf16.msra.mxu0 %v1005
        %1142 = vmatprep.subr.bf16.mxu0 0
        %1143 = vmatpush1.bf16.msra.mxu0 %v1006
        %1144 = vmatprep.subr.bf16.mxu0 0
        %1145 = vmatpush1.bf16.msra.mxu0 %v1007
        %1146 = vmatprep.subr.bf16.mxu0 0
        %1147 = vmatpush1.bf16.msra.mxu0 0
        %1148 = vmatprep.subr.bf16.mxu0 0
        %1149 = vmatpush1.bf16.msra.mxu0 0
        %1150 = vmatprep.subr.bf16.mxu0 0
        %1151 = vmatpush1.bf16.msra.mxu0 0
        %1152 = vmatprep.subr.bf16.mxu0 0
        %1153 = vmatpush1.bf16.msra.mxu0 0
        %1154 = vmatprep.subr.bf16.mxu0 0
        %1155 = vmatpush1.bf16.msra.mxu0 0
        %1156 = vmatprep.subr.bf16.mxu0 0
        %1157 = vmatpush1.bf16.msra.mxu0 0
        %1158 = vmatprep.subr.bf16.mxu0 0
        %1159 = vmatpush1.bf16.msra.mxu0 0
        %1160 = vmatprep.subr.bf16.mxu0 0
        %1161 = vmatpush1.bf16.msra.mxu0 0
        %1162 = vmatprep.mubr.bf16.mxu0 0
        %1163 = vmatmul.mubr.bf16.gmra.mrb[0].mxu0 %v802
        %v1164 = vpop.f32.mrb[0].mxu0
        %v1165 = vadd.f32 %v1124, %v1164
        %v1166 = vpop.f32.mrb[0].mxu0
        %v1167 = vpop.f32.mrb[0].mxu0
        %v1168 = vadd.f32 %v1127, %v1167
        %v1169 = vpop.f32.mrb[0].mxu0
        %1170 = vdwg.mxu0
        %v1171 = vmax.f32 %v1165, 0.0
        %v1172 = vmax.f32 %v1168, 0.0
        %v1173 = vpack.c.bf16 %v1172, %v1171
        %v1174 = vld [vmem:[#allocation11] sm:$0xf]
        %v1175 = vld [vmem:[#allocation11 + $0x4] sm:$0xf]
        %v1176 = vld [vmem:[#allocation11 + $0x8] sm:$0xf]
        %v1177 = vld [vmem:[#allocation11 + $0xc] sm:$0xf]
        %v1178 = vld [vmem:[#allocation11 + $0x10] sm:$0xf]
        %v1179 = vld [vmem:[#allocation11 + $0x14] sm:$0xf]
        %v1180 = vld [vmem:[#allocation11 + $0x18] sm:$0xf]
        %v1181 = vld [vmem:[#allocation11 + $0x1c] sm:$0xf]
        %v1182 = vld [vmem:[#allocation11 + $0x20] sm:$0xf]
        %v1183 = vld [vmem:[#allocation11 + $0x24] sm:$0xf]
        %v1184 = vld [vmem:[#allocation11 + $0x28] sm:$0xf]
        %v1185 = vld [vmem:[#allocation11 + $0x2c] sm:$0xf]
        %v1186 = vld [vmem:[#allocation11 + $0x30] sm:$0xf]
        %v1187 = vld [vmem:[#allocation11 + $0x34] sm:$0xf]
        %v1188 = vld [vmem:[#allocation11 + $0x38] sm:$0xf]
        %v1189 = vld [vmem:[#allocation11 + $0x3c] sm:$0xf]
        %v1190 = vld [vmem:[%s8] sm:$0x1]
        %v1192 = vlaneseq
        %v1193 = vshrl.u32 %v1192, 7
        %v1194 = vsub.s32 0, %v1193
        %v1195 = vrot.slane %v1190, %v1194
        %v1213 = vunpack.c.l.b16 %v1174
        %v1214 = vunpack.c.l.b16 %v1175
        %v1215 = vunpack.c.l.b16 %v1176
        %v1216 = vunpack.c.l.b16 %v1177
        %v1217 = vunpack.c.l.b16 %v1178
        %v1218 = vunpack.c.l.b16 %v1179
        %v1219 = vunpack.c.l.b16 %v1180
        %v1220 = vunpack.c.l.b16 %v1181
        %v1221 = vunpack.c.l.b16 %v1182
        %v1222 = vunpack.c.l.b16 %v1183
        %v1223 = vunpack.c.l.b16 %v1184
        %v1224 = vunpack.c.l.b16 %v1185
        %v1225 = vunpack.c.l.b16 %v1186
        %v1226 = vunpack.c.l.b16 %v1187
        %v1227 = vunpack.c.l.b16 %v1188
        %v1228 = vunpack.c.l.b16 %v1189
        %v1229 = vpack.c.b16 %v1214, %v1213
        %v1230 = vpack.c.b16 %v1216, %v1215
        %v1231 = vpack.c.b16 %v1218, %v1217
        %v1232 = vpack.c.b16 %v1220, %v1219
        %v1233 = vpack.c.b16 %v1222, %v1221
        %v1234 = vpack.c.b16 %v1224, %v1223
        %v1235 = vpack.c.b16 %v1226, %v1225
        %v1236 = vpack.c.b16 %v1228, %v1227
        %1245 = vmatprep.subr.bf16.mxu0 0
        %1246 = vmatpush1.bf16.msra.mxu0 %v1229
        %1247 = vmatprep.subr.bf16.mxu0 0
        %1248 = vmatpush1.bf16.msra.mxu0 %v1230
        %1249 = vmatprep.subr.bf16.mxu0 0
        %1250 = vmatpush1.bf16.msra.mxu0 %v1231
        %1251 = vmatprep.subr.bf16.mxu0 0
        %1252 = vmatpush1.bf16.msra.mxu0 %v1232
        %1253 = vmatprep.subr.bf16.mxu0 0
        %1254 = vmatpush1.bf16.msra.mxu0 %v1233
        %1255 = vmatprep.subr.bf16.mxu0 0
        %1256 = vmatpush1.bf16.msra.mxu0 %v1234
        %1257 = vmatprep.subr.bf16.mxu0 0
        %1258 = vmatpush1.bf16.msra.mxu0 %v1235
        %1259 = vmatprep.subr.bf16.mxu0 0
        %1260 = vmatpush1.bf16.msra.mxu0 %v1236
        %1261 = vmatprep.subr.bf16.mxu0 0
        %1262 = vmatpush1.bf16.msra.mxu0 0
        %1263 = vmatprep.subr.bf16.mxu0 0
        %1264 = vmatpush1.bf16.msra.mxu0 0
        %1265 = vmatprep.subr.bf16.mxu0 0
        %1266 = vmatpush1.bf16.msra.mxu0 0
        %1267 = vmatprep.subr.bf16.mxu0 0
        %1268 = vmatpush1.bf16.msra.mxu0 0
        %1269 = vmatprep.subr.bf16.mxu0 0
        %1270 = vmatpush1.bf16.msra.mxu0 0
        %1271 = vmatprep.subr.bf16.mxu0 0
        %1272 = vmatpush1.bf16.msra.mxu0 0
        %1273 = vmatprep.subr.bf16.mxu0 0
        %1274 = vmatpush1.bf16.msra.mxu0 0
        %1275 = vmatprep.subr.bf16.mxu0 0
        %1276 = vmatpush1.bf16.msra.mxu0 0
        %1277 = vmatprep.mubr.bf16.mxu0 0
        %1278 = vmatmul.mubr.bf16.gmra.mrb[0].mxu0 %v1173
        %v1279 = vpop.f32.mrb[0].mxu0
        %v1280 = vadd.f32 %v1195, %v1279
        %v1281 = vpop.f32.mrb[0].mxu0
        %v1282 = vpop.f32.mrb[0].mxu0
        %v1283 = vadd.f32 %v1195, %v1282
        %v1284 = vpop.f32.mrb[0].mxu0
        %1285 = vdwg.mxu0
        %1286 = vst [vmem:[%s515] sm:$0xff] %v1280
        %1287 = vst [vmem:[%s515 + $0x8] sm:$0xff] %v1283
        %s1288 = sand.u32 %s279, 1
        %s1289 = scalar_lea.sflag [#allocation4], %s1288
        %s1290 = sand.u32 %s279, 1
        %s1291 = smul.addr %s1290, 16
        %s1292 = scalar_lea.vmem [#allocation13], %s1291
        // Predicated region
        $region81: #{tpu_custom_call.1} parent=55 // pred_check
          %p1293 = pneg %p289
        $region82: #{tpu_custom_call.1} parent=55 // pred_check_branch
          %1295 = sbr.rel (%p1293) target = $region84
        $region83: #{tpu_custom_call.1} parent=55 // pred_region
          %s1296 = smul.u32 2, %s36
          %s1298 = ssub.s32 256, 256
          %1299 = vsyncadd %s1289, %s1298
          %s1300 = smul.addr %s35, 2
          %s1301 = sadd.s32 %s1296, %s1300
          %s1302 = smul.addr %s1301, 128
          %s1303 = scalar_lea.hbm %s9, %s1302
          %s1304 = sshll.u32 %s1292, 4
          %s1305 = int_to_ptr.vmem [resolvable:$true] %s1304
          %1310 = dma.vmem_to_hbm [thread:$0]  %s1305, 256, %s1303, %s1289, 128, 128, 8
        $region84: #{tpu_custom_call.1} parent=55 // pred_fallthru
          _
      $region56: #{tpu_custom_call.1} parent=5 // pred_fallthru
        _
      %p1311 = scmp.le.s32.totalorder 2, %s26
      // Predicated region
      $region85: #{tpu_custom_call.1} parent=5 // pred_check
        %p1312 = pneg %p1311
      $region86: #{tpu_custom_call.1} parent=5 // pred_check_branch
        %1314 = sbr.rel (%p1312) target = $region88
      $region87: #{tpu_custom_call.1} parent=5 // pred_region
        %s1315 = ssub.s32 %s26, 2
        // Predicated region
        $region89: #{tpu_custom_call.1} parent=87 // pred_check
          %p1316 = pneg %p295
        $region90: #{tpu_custom_call.1} parent=87 // pred_check_branch
          %1318 = sbr.rel (%p1316) target = $region92
        $region91: #{tpu_custom_call.1} parent=87 // pred_region
          %s1319 = sand.u32 %s280, 1
          %s1320 = scalar_lea.sflag [#allocation4], %s1319
          %s1321 = sand.u32 %s280, 1
          %s1322 = smul.addr %s1321, 16
          %s1323 = scalar_lea.vmem [#allocation13], %s1322
          %1324 = dma.done %s1320, 256
        $region92: #{tpu_custom_call.1} parent=87 // pred_fallthru
          _
      $region88: #{tpu_custom_call.1} parent=5 // pred_fallthru
        _
    $region6: #{tpu_custom_call.1} parent=1 // loop_footer
      %s30 = sadd.s32 1, %s26
    $region7: #{tpu_custom_call.1} parent=1 // loop_footer_branch
      %25 = sbr.rel target = $region3
    $region8: #{tpu_custom_call.1} parent=1 // loop_exit
      _
    %1325 = vsyncpa [#allocation3], 1
    %s1326 = scalar_lea.sflag [#allocation3], 1
    %1327 = vsyncpa %s1326, 1
    %1328 = vsyncpa [#allocation6], 1
    %s1329 = scalar_lea.sflag [#allocation6], 1
    %1330 = vsyncpa %s1329, 1
    %1331 = vsyncpa [#allocation9], 1
    %1332 = vsyncpa [#allocation12], 1
    %1333 = vsyncpa [#allocation4], 1
    %s1334 = scalar_lea.sflag [#allocation4], 1
    %1335 = vsyncpa %s1334, 1

</llo_original>
